<compile_context>
chip_gen: v7x
topology: tpu7x:2x2x1
jax: 0.10.0
libtpu: 0.0.40
codegen_flags: <defaults>
</compile_context>

<pallas_src>
import jax
import jax.numpy as jnp
from jax import lax
from jax.experimental import pallas as pl
from jax.experimental.pallas import tpu as pltpu


def _round_up(x, m):
    return ((x + m - 1) // m) * m


def _pick_batch_block(b_pad):
    # Split the batch into >=2 blocks only when it is big enough; keeps bf16 (16,128)
    # tile alignment when splitting. Parallel batch blocks shard across v7x's 2 TCs.
    for cand in (64, 32, 16):
        if b_pad > cand and b_pad % cand == 0:
            return cand
    return b_pad


def _make_lstm_kernel(Tc, H_pad):
    def kernel(scalars_ref,        # SMEM (2,) int32: [max_len, last_chunk]
               lens_ref,           # (Bb, H_pad) int32
               x_ref,              # (Tc, Bb, E_pad) bf16
               w_ref,              # (E_pad + H_pad, 4*H_pad) bf16 (fused W_ih/W_hh)
               b_ref,              # (1, 4*H_pad) f32
               fcw_ref,            # (H_pad, O_pad) bf16
               fcb_ref,            # (1, O_pad) f32
               out_ref,            # (Bb, O_pad) f32
               h_sc, c_sc):        # (Bb, H_pad) f32 scratch
        c_idx = pl.program_id(1)
        n_chunks = pl.num_programs(1)

        @pl.when(c_idx == 0)
        def _init():
            h_sc[...] = jnp.zeros_like(h_sc)
            c_sc[...] = jnp.zeros_like(c_sc)

        max_len = scalars_ref[0]

        # Skip chunks that start past the longest sequence in the batch (dead work).
        @pl.when(c_idx * Tc < max_len)
        def _recurrence():
            # Hoist loop-invariant loads out of the unrolled inner loop.
            w = w_ref[...]
            bias = b_ref[...]
            lens = lens_ref[...]
            t_base = c_idx * Tc

            def step(j, carry):
                h, c = carry
                x_t = x_ref[j].astype(jnp.float32)            # (Bb, E_pad)
                xh = jnp.concatenate([x_t, h], axis=1)        # f32, lane boundary at 128-multiple
                gates = jnp.dot(xh.astype(jnp.bfloat16), w,   # single fused MXU push
                                preferred_element_type=jnp.float32) + bias
                i_g = jax.nn.sigmoid(gates[:, 0 * H_pad:1 * H_pad])
                f_g = jax.nn.sigmoid(gates[:, 1 * H_pad:2 * H_pad])
                g_g = jnp.tanh(gates[:, 2 * H_pad:3 * H_pad])
                o_g = jax.nn.sigmoid(gates[:, 3 * H_pad:4 * H_pad])
                c_new = f_g * c + i_g * g_g
                h_new = o_g * jnp.tanh(c_new)
                # pack_padded_sequence semantics: freeze state for finished sequences.
                valid = (t_base + j) < lens                   # (Bb, H_pad) bool
                h = jnp.where(valid, h_new, h)
                c = jnp.where(valid, c_new, c)
                return h, c

            h_fin, c_fin = lax.fori_loop(0, Tc, step, (h_sc[...], c_sc[...]),
                                         unroll=True)
            h_sc[...] = h_fin
            c_sc[...] = c_fin

        @pl.when(c_idx == n_chunks - 1)
        def _epilogue():
            logits = (jnp.dot(h_sc[...].astype(jnp.bfloat16), fcw_ref[...],
                              preferred_element_type=jnp.float32)
                      + fcb_ref[...])
            out_ref[...] = logits.astype(out_ref.dtype)

    return kernel


def simple_lstm_forward(text, text_lengths, params, *, time_chunk=64):
    """text: [B, T] int32; text_lengths: [B] int32."""
    emb = params["embedding"]           # [V, E]
    w_ih = params["w_ih"]               # [E, 4H]
    w_hh = params["w_hh"]               # [H, 4H]
    b = params["b"]                     # [1, 4H]
    fc_w = params["fc_w"]               # [H, O]
    fc_b = params["fc_b"]               # [1, O]

    B, T = text.shape
    E = emb.shape[1]
    H = w_hh.shape[0]
    O = fc_w.shape[1]

    E_pad = _round_up(E, 128)
    H_pad = _round_up(H, 128)
    O_pad = _round_up(O, 128)
    B_pad = _round_up(B, 8)
    Tc = max(1, min(time_chunk, T))
    T_pad = _round_up(T, Tc)
    Bb = _pick_batch_block(B_pad)
    nb = B_pad // Bb
    nc = T_pad // Tc

    # ---- glue (plain JAX): embedding gather, time-major layout, zero padding ----
    # TODO(synk): embedding-row gather stays in XLA; a Pallas DMA-gather kernel is only worth it
    # at much larger vocab/seq sizes.
    embedded = jnp.take(emb, text, axis=0)                       # [B, T, E] f32
    x = jnp.transpose(embedded, (1, 0, 2))                       # [T, B, E] time-major
    x = jnp.pad(x, ((0, T_pad - T), (0, B_pad - B), (0, E_pad - E)))
    x = x.astype(jnp.bfloat16)                                   # [T_pad, B_pad, E_pad]

    # Fused + padded gate weights: rows [0:E) = W_ih, rows [E_pad:E_pad+H) = W_hh,
    # gate g occupies lanes [g*H_pad, g*H_pad + H). Zero padding keeps padded h/c at exactly 0.
    w4 = jnp.zeros((E_pad + H_pad, 4, H_pad), jnp.float32)
    w4 = w4.at[:E, :, :H].set(w_ih.reshape(E, 4, H))
    w4 = w4.at[E_pad:E_pad + H, :, :H].set(w_hh.reshape(H, 4, H))
    W = w4.reshape(E_pad + H_pad, 4 * H_pad).astype(jnp.bfloat16)

    b4 = jnp.zeros((4, H_pad), jnp.float32).at[:, :H].set(b.reshape(4, H))
    b4 = b4.reshape(1, 4 * H_pad)

    fcw_p = jnp.zeros((H_pad, O_pad), jnp.float32).at[:H, :O].set(fc_w)
    fcw_p = fcw_p.astype(jnp.bfloat16)
    fcb_p = jnp.zeros((1, O_pad), jnp.float32).at[:, :O].set(fc_b)

    lens = jnp.zeros((B_pad,), jnp.int32).at[:B].set(text_lengths.astype(jnp.int32))
    lens_b = jnp.broadcast_to(lens[:, None], (B_pad, H_pad)).astype(jnp.int32)
    max_len = jnp.max(lens).astype(jnp.int32)
    last_chunk = jnp.maximum(max_len - 1, 0) // Tc
    scalars = jnp.stack([max_len, last_chunk]).astype(jnp.int32)  # -> SMEM via scalar prefetch

    kernel = _make_lstm_kernel(Tc, H_pad)

    grid_spec = pltpu.PrefetchScalarGridSpec(
        num_scalar_prefetch=1,
        grid=(nb, nc),
        in_specs=[
            # per-row lengths (loaded once per chunk, constant across the time axis)
            pl.BlockSpec((Bb, H_pad), lambda bi, ci, s: (bi, 0)),
            # x chunk; clamp the chunk index so dead chunks re-use the previous block (no DMA)
            pl.BlockSpec((Tc, Bb, E_pad),
                         lambda bi, ci, s: (jnp.minimum(ci, s[1]), bi, 0)),
            pl.BlockSpec((E_pad + H_pad, 4 * H_pad), lambda bi, ci, s: (0, 0)),  # fused W
            pl.BlockSpec((1, 4 * H_pad), lambda bi, ci, s: (0, 0)),              # bias
            pl.BlockSpec((H_pad, O_pad), lambda bi, ci, s: (0, 0)),              # fc weight
            pl.BlockSpec((1, O_pad), lambda bi, ci, s: (0, 0)),                  # fc bias
        ],
        out_specs=pl.BlockSpec((Bb, O_pad), lambda bi, ci, s: (bi, 0)),          # lane-dense out
        scratch_shapes=[
            pltpu.VMEM((Bb, H_pad), jnp.float32),    # h
            pltpu.VMEM((Bb, H_pad), jnp.float32),    # c
        ],
    )

    # VMEM use here is tiny (<< 32 MiB scoped default on all gens). At production sizes,
    # re-derive Tc / Bb against v7x's 64 MiB physical VMEM and set vmem_limit_bytes explicitly.
    out_pad = pl.pallas_call(
        kernel,
        out_shape=jax.ShapeDtypeStruct((B_pad, O_pad), jnp.float32),
        grid_spec=grid_spec,
        compiler_params=pltpu.CompilerParams(
            dimension_semantics=("parallel", "arbitrary")),
    )(scalars, lens_b, x, W, b4, fcw_p, fcb_p)

    return out_pad[:B, :O]


def simple_lstm_reference(text, text_lengths, params):
    """Pure-JAX f32 reference (same math, lax.scan) for a sanity check."""
    emb = params["embedding"]
    w_ih, w_hh, b = params["w_ih"], params["w_hh"], params["b"]
    fc_w, fc_b = params["fc_w"], params["fc_b"]
    B, T = text.shape
    H = w_hh.shape[0]

    x = jnp.take(emb, text, axis=0)                    # [B, T, E]
    lengths = text_lengths.astype(jnp.int32)

    def step(carry, inp):
        h, c = carry
        x_t, t = inp
        gates = x_t @ w_ih + h @ w_hh + b
        i_g = jax.nn.sigmoid(gates[:, 0 * H:1 * H])
        f_g = jax.nn.sigmoid(gates[:, 1 * H:2 * H])
        g_g = jnp.tanh(gates[:, 2 * H:3 * H])
        o_g = jax.nn.sigmoid(gates[:, 3 * H:4 * H])
        c_new = f_g * c + i_g * g_g
        h_new = o_g * jnp.tanh(c_new)
        valid = (t < lengths)[:, None]
        return (jnp.where(valid, h_new, h), jnp.where(valid, c_new, c)), None

    h0 = jnp.zeros((B, H), jnp.float32)
    c0 = jnp.zeros((B, H), jnp.float32)
    (h_last, _), _ = lax.scan(step, (h0, c0),
                              (jnp.transpose(x, (1, 0, 2)), jnp.arange(T)))
    return h_last @ fc_w + fc_b


def init_params(key, vocab_size, embedding_dim, hidden_dim, output_dim, pad_idx):
    ks = jax.random.split(key, 7)
    emb = 0.1 * jax.random.normal(ks[0], (vocab_size, embedding_dim), jnp.float32)
    emb = emb.at[pad_idx].set(0.0)   # nn.Embedding(padding_idx=...) zeroes this row at init
    w_ih = 0.1 * jax.random.normal(ks[1], (embedding_dim, 4 * hidden_dim), jnp.float32)
    w_hh = 0.1 * jax.random.normal(ks[2], (hidden_dim, 4 * hidden_dim), jnp.float32)
    b_ih = 0.1 * jax.random.normal(ks[3], (4 * hidden_dim,), jnp.float32)
    b_hh = 0.1 * jax.random.normal(ks[4], (4 * hidden_dim,), jnp.float32)
    fc_w = 0.1 * jax.random.normal(ks[5], (hidden_dim, output_dim), jnp.float32)
    fc_b = 0.1 * jax.random.normal(ks[6], (output_dim,), jnp.float32)
    return {
        "embedding": emb,
        "w_ih": w_ih,
        "w_hh": w_hh,
        "b": (b_ih + b_hh).reshape(1, 4 * hidden_dim),
        "fc_w": fc_w,
        "fc_b": fc_b.reshape(1, output_dim),
    }


if __name__ == "__main__":
    VOCAB, EMB_DIM, HID_DIM, OUT_DIM, PAD_IDX = 50, 16, 32, 5, 0
    B, T = 2, 8

    key = jax.random.PRNGKey(0)
    k_par, k_tok, k_len = jax.random.split(key, 3)

    params = init_params(k_par, VOCAB, EMB_DIM, HID_DIM, OUT_DIM, PAD_IDX)

    lengths = jnp.array([8, 5], dtype=jnp.int32)        # variable-length sequences
    tokens = jax.random.randint(k_tok, (B, T), 1, VOCAB, dtype=jnp.int32)
    # zero-pad past each sequence's length (as a padded batch would be)
    pad_mask = jnp.arange(T)[None, :] < lengths[:, None]
    tokens = jnp.where(pad_mask, tokens, PAD_IDX).astype(jnp.int32)

    out = simple_lstm_forward(tokens, lengths, params)
    out = jax.block_until_ready(out)

    ref = simple_lstm_reference(tokens, lengths, params)
    assert out.shape == (B, OUT_DIM)
    # bf16 MXU operands (f32 accumulation) -> slightly looser tolerance than pure f32.
    assert jnp.allclose(out, ref, atol=2e-2, rtol=2e-2), (out, ref)

    print("KERNEL_OK")
</pallas_src>

<mosaic_0001>
module attributes {stable_mosaic.version = 11 : i64} {
  func.func @kernel(%arg0: i32, %arg1: i32, %arg2: memref<2xi32, #tpu.memory_space<smem>>, %arg3: memref<8x128xi32, #tpu.memory_space<vmem>>, %arg4: memref<8x8x128xbf16, #tpu.memory_space<vmem>>, %arg5: memref<256x512xbf16, #tpu.memory_space<vmem>>, %arg6: memref<1x512xf32, #tpu.memory_space<vmem>>, %arg7: memref<128x128xbf16, #tpu.memory_space<vmem>>, %arg8: memref<1x128xf32, #tpu.memory_space<vmem>>, %arg9: memref<8x128xf32, #tpu.memory_space<vmem>>, %arg10: memref<8x128xf32, #tpu.memory_space<vmem>>, %arg11: memref<8x128xf32, #tpu.memory_space<vmem>>) attributes {dimension_semantics = [#tpu.dimension_semantics<parallel>, #tpu.dimension_semantics<arbitrary>], iteration_bounds = array<i64: 1, 1>, scalar_prefetch = 1 : i64, scratch_operands = 2 : i64, tpu.core_type = #tpu.core_type<tc>, window_params = [{transform_indices = @transform_0, window_bounds = array<i64: 8, 128>}, {transform_indices = @transform_1, window_bounds = array<i64: 8, 8, 128>}, {pipeline_mode = #tpu.pipeline_mode<synchronous>, transform_indices = @transform_2, window_bounds = array<i64: 256, 512>}, {pipeline_mode = #tpu.pipeline_mode<synchronous>, transform_indices = @transform_3, window_bounds = array<i64: 1, 512>}, {pipeline_mode = #tpu.pipeline_mode<synchronous>, transform_indices = @transform_4, window_bounds = array<i64: 128, 128>}, {pipeline_mode = #tpu.pipeline_mode<synchronous>, transform_indices = @transform_5, window_bounds = array<i64: 1, 128>}, {transform_indices = @transform_6, window_bounds = array<i64: 8, 128>}]} {
    %c0_i32 = arith.constant 0 : i32
    %0 = arith.cmpi eq, %arg1, %c0_i32 : i32
    %1 = arith.extui %0 : i1 to i32
    %c0_i32_0 = arith.constant 0 : i32
    %2 = arith.cmpi ne, %1, %c0_i32_0 : i32
    scf.if %2 {
      %cst = arith.constant 0.000000e+00 : f32
      %11 = vector.broadcast %cst : f32 to vector<8x128xf32>
      %c0_4 = arith.constant 0 : index
      %c0_5 = arith.constant 0 : index
      %12 = vector.load %arg10[%c0_4, %c0_5] : memref<8x128xf32, #tpu.memory_space<vmem>>, vector<8x128xf32>
      tpu.vector_store %arg10[%c0_4, %c0_5], %11 {strides = array<i32>} : memref<8x128xf32, #tpu.memory_space<vmem>>, vector<8x128xf32>,
      %cst_6 = arith.constant 0.000000e+00 : f32
      %13 = vector.broadcast %cst_6 : f32 to vector<8x128xf32>
      %c0_7 = arith.constant 0 : index
      %c0_8 = arith.constant 0 : index
      %14 = vector.load %arg11[%c0_7, %c0_8] : memref<8x128xf32, #tpu.memory_space<vmem>>, vector<8x128xf32>
      tpu.vector_store %arg11[%c0_7, %c0_8], %13 {strides = array<i32>} : memref<8x128xf32, #tpu.memory_space<vmem>>, vector<8x128xf32>,
    } else {
    }
    %c0 = arith.constant 0 : index
    %3 = memref.load %arg2[%c0] : memref<2xi32, #tpu.memory_space<smem>>
    %c8_i32 = arith.constant 8 : i32
    %4 = arith.muli %arg1, %c8_i32 : i32
    %5 = arith.cmpi slt, %4, %3 : i32
    %6 = arith.extui %5 : i1 to i32
    %c0_i32_1 = arith.constant 0 : i32
    %7 = arith.cmpi ne, %6, %c0_i32_1 : i32
    scf.if %7 {
      %c0_4 = arith.constant 0 : index
      %c0_5 = arith.constant 0 : index
      %11 = vector.load %arg5[%c0_4, %c0_5] : memref<256x512xbf16, #tpu.memory_space<vmem>>, vector<256x512xbf16>
      %c0_6 = arith.constant 0 : index
      %c0_7 = arith.constant 0 : index
      %12 = vector.load %arg6[%c0_6, %c0_7] : memref<1x512xf32, #tpu.memory_space<vmem>>, vector<1x512xf32>
      %c0_8 = arith.constant 0 : index
      %c0_9 = arith.constant 0 : index
      %13 = vector.load %arg3[%c0_8, %c0_9] : memref<8x128xi32, #tpu.memory_space<vmem>>, vector<8x128xi32>
      %c8_i32_10 = arith.constant 8 : i32
      %14 = arith.muli %arg1, %c8_i32_10 : i32
      %c0_11 = arith.constant 0 : index
      %c0_12 = arith.constant 0 : index
      %15 = vector.load %arg10[%c0_11, %c0_12] : memref<8x128xf32, #tpu.memory_space<vmem>>, vector<8x128xf32>
      %c0_13 = arith.constant 0 : index
      %c0_14 = arith.constant 0 : index
      %16 = vector.load %arg11[%c0_13, %c0_14] : memref<8x128xf32, #tpu.memory_space<vmem>>, vector<8x128xf32>
      %c0_i32_15 = arith.constant 0 : i32
      %17 = arith.index_cast %c0_i32_15 : i32 to index
      %c0_16 = arith.constant 0 : index
      %c0_17 = arith.constant 0 : index
      %18 = vector.load %arg4[%17, %c0_16, %c0_17] : memref<8x8x128xbf16, #tpu.memory_space<vmem>>, vector<1x8x128xbf16>
      %19 = vector.shape_cast %18 : vector<1x8x128xbf16> to vector<8x128xbf16>
      %20 = arith.extf %19 : vector<8x128xbf16> to vector<8x128xf32>
      %21 = tpu.concatenate %20, %15 in 1 : vector<8x128xf32>, vector<8x128xf32> -> vector<8x256xf32>
      %22 = arith.truncf %21 : vector<8x256xf32> to vector<8x256xbf16>
      %cst = arith.constant dense<0.000000e+00> : vector<8x512xf32>
      %23 = tpu.matmul %22, %11, %cst {dimension_numbers = #tpu.dot_dimension_numbers<[1], [0], [0], [1], [0, 0, 1, 1], [], []>} : vector<8x256xbf16>, vector<256x512xbf16>, vector<8x512xf32> -> vector<8x512xf32>
      %24 = vector.broadcast %12 : vector<1x512xf32> to vector<8x512xf32>
      %25 = arith.addf %23, %24 : vector<8x512xf32>
      %26 = vector.extract_strided_slice %25 {offsets = [0, 0], sizes = [8, 128], strides = [1, 1]} : vector<8x512xf32> to vector<8x128xf32>
      %27 = arith.negf %26 : vector<8x128xf32>
      %28 = math.exp %27 : vector<8x128xf32>
      %cst_18 = arith.constant 1.000000e+00 : f32
      %29 = vector.broadcast %cst_18 : f32 to vector<8x128xf32>
      %30 = arith.addf %29, %28 : vector<8x128xf32>
      %31 = arith.divf %29, %30 : vector<8x128xf32>
      %32 = vector.extract_strided_slice %25 {offsets = [0, 128], sizes = [8, 128], strides = [1, 1]} : vector<8x512xf32> to vector<8x128xf32>
      %33 = arith.negf %32 : vector<8x128xf32>
      %34 = math.exp %33 : vector<8x128xf32>
      %cst_19 = arith.constant 1.000000e+00 : f32
      %35 = vector.broadcast %cst_19 : f32 to vector<8x128xf32>
      %36 = arith.addf %35, %34 : vector<8x128xf32>
      %37 = arith.divf %35, %36 : vector<8x128xf32>
      %38 = vector.extract_strided_slice %25 {offsets = [0, 256], sizes = [8, 128], strides = [1, 1]} : vector<8x512xf32> to vector<8x128xf32>
      %39 = math.tanh %38 : vector<8x128xf32>
      %40 = vector.extract_strided_slice %25 {offsets = [0, 384], sizes = [8, 128], strides = [1, 1]} : vector<8x512xf32> to vector<8x128xf32>
      %41 = arith.negf %40 : vector<8x128xf32>
      %42 = math.exp %41 : vector<8x128xf32>
      %cst_20 = arith.constant 1.000000e+00 : f32
      %43 = vector.broadcast %cst_20 : f32 to vector<8x128xf32>
      %44 = arith.addf %43, %42 : vector<8x128xf32>
      %45 = arith.divf %43, %44 : vector<8x128xf32>
      %46 = arith.mulf %37, %16 : vector<8x128xf32>
      %47 = arith.mulf %31, %39 : vector<8x128xf32>
      %48 = arith.addf %46, %47 : vector<8x128xf32>
      %49 = math.tanh %48 : vector<8x128xf32>
      %50 = arith.mulf %45, %49 : vector<8x128xf32>
      %51 = arith.addi %14, %c0_i32_15 : i32
      %52 = vector.broadcast %51 : i32 to vector<8x128xi32>
      %53 = arith.cmpi slt, %52, %13 : vector<8x128xi32>
      %54 = arith.select %53, %50, %15 : vector<8x128xi1>, vector<8x128xf32>
      %55 = arith.select %53, %48, %16 : vector<8x128xi1>, vector<8x128xf32>
      %c1_i32 = arith.constant 1 : i32
      %56 = arith.index_cast %c1_i32 : i32 to index
      %c0_21 = arith.constant 0 : index
      %c0_22 = arith.constant 0 : index
      %57 = vector.load %arg4[%56, %c0_21, %c0_22] : memref<8x8x128xbf16, #tpu.memory_space<vmem>>, vector<1x8x128xbf16>
      %58 = vector.shape_cast %57 : vector<1x8x128xbf16> to vector<8x128xbf16>
      %59 = arith.extf %58 : vector<8x128xbf16> to vector<8x128xf32>
      %60 = tpu.concatenate %59, %54 in 1 : vector<8x128xf32>, vector<8x128xf32> -> vector<8x256xf32>
      %61 = arith.truncf %60 : vector<8x256xf32> to vector<8x256xbf16>
      %cst_23 = arith.constant dense<0.000000e+00> : vector<8x512xf32>
      %62 = tpu.matmul %61, %11, %cst_23 {dimension_numbers = #tpu.dot_dimension_numbers<[1], [0], [0], [1], [0, 0, 1, 1], [], []>} : vector<8x256xbf16>, vector<256x512xbf16>, vector<8x512xf32> -> vector<8x512xf32>
      %63 = vector.broadcast %12 : vector<1x512xf32> to vector<8x512xf32>
      %64 = arith.addf %62, %63 : vector<8x512xf32>
      %65 = vector.extract_strided_slice %64 {offsets = [0, 0], sizes = [8, 128], strides = [1, 1]} : vector<8x512xf32> to vector<8x128xf32>
      %66 = arith.negf %65 : vector<8x128xf32>
      %67 = math.exp %66 : vector<8x128xf32>
      %cst_24 = arith.constant 1.000000e+00 : f32
      %68 = vector.broadcast %cst_24 : f32 to vector<8x128xf32>
      %69 = arith.addf %68, %67 : vector<8x128xf32>
      %70 = arith.divf %68, %69 : vector<8x128xf32>
      %71 = vector.extract_strided_slice %64 {offsets = [0, 128], sizes = [8, 128], strides = [1, 1]} : vector<8x512xf32> to vector<8x128xf32>
      %72 = arith.negf %71 : vector<8x128xf32>
      %73 = math.exp %72 : vector<8x128xf32>
      %cst_25 = arith.constant 1.000000e+00 : f32
      %74 = vector.broadcast %cst_25 : f32 to vector<8x128xf32>
      %75 = arith.addf %74, %73 : vector<8x128xf32>
      %76 = arith.divf %74, %75 : vector<8x128xf32>
      %77 = vector.extract_strided_slice %64 {offsets = [0, 256], sizes = [8, 128], strides = [1, 1]} : vector<8x512xf32> to vector<8x128xf32>
      %78 = math.tanh %77 : vector<8x128xf32>
      %79 = vector.extract_strided_slice %64 {offsets = [0, 384], sizes = [8, 128], strides = [1, 1]} : vector<8x512xf32> to vector<8x128xf32>
      %80 = arith.negf %79 : vector<8x128xf32>
      %81 = math.exp %80 : vector<8x128xf32>
      %cst_26 = arith.constant 1.000000e+00 : f32
      %82 = vector.broadcast %cst_26 : f32 to vector<8x128xf32>
      %83 = arith.addf %82, %81 : vector<8x128xf32>
      %84 = arith.divf %82, %83 : vector<8x128xf32>
      %85 = arith.mulf %76, %55 : vector<8x128xf32>
      %86 = arith.mulf %70, %78 : vector<8x128xf32>
      %87 = arith.addf %85, %86 : vector<8x128xf32>
      %88 = math.tanh %87 : vector<8x128xf32>
      %89 = arith.mulf %84, %88 : vector<8x128xf32>
      %90 = arith.addi %14, %c1_i32 : i32
      %91 = vector.broadcast %90 : i32 to vector<8x128xi32>
      %92 = arith.cmpi slt, %91, %13 : vector<8x128xi32>
      %93 = arith.select %92, %89, %54 : vector<8x128xi1>, vector<8x128xf32>
      %94 = arith.select %92, %87, %55 : vector<8x128xi1>, vector<8x128xf32>
      %c2_i32 = arith.constant 2 : i32
      %95 = arith.index_cast %c2_i32 : i32 to index
      %c0_27 = arith.constant 0 : index
      %c0_28 = arith.constant 0 : index
      %96 = vector.load %arg4[%95, %c0_27, %c0_28] : memref<8x8x128xbf16, #tpu.memory_space<vmem>>, vector<1x8x128xbf16>
      %97 = vector.shape_cast %96 : vector<1x8x128xbf16> to vector<8x128xbf16>
      %98 = arith.extf %97 : vector<8x128xbf16> to vector<8x128xf32>
      %99 = tpu.concatenate %98, %93 in 1 : vector<8x128xf32>, vector<8x128xf32> -> vector<8x256xf32>
      %100 = arith.truncf %99 : vector<8x256xf32> to vector<8x256xbf16>
      %cst_29 = arith.constant dense<0.000000e+00> : vector<8x512xf32>
      %101 = tpu.matmul %100, %11, %cst_29 {dimension_numbers = #tpu.dot_dimension_numbers<[1], [0], [0], [1], [0, 0, 1, 1], [], []>} : vector<8x256xbf16>, vector<256x512xbf16>, vector<8x512xf32> -> vector<8x512xf32>
      %102 = vector.broadcast %12 : vector<1x512xf32> to vector<8x512xf32>
      %103 = arith.addf %101, %102 : vector<8x512xf32>
      %104 = vector.extract_strided_slice %103 {offsets = [0, 0], sizes = [8, 128], strides = [1, 1]} : vector<8x512xf32> to vector<8x128xf32>
      %105 = arith.negf %104 : vector<8x128xf32>
      %106 = math.exp %105 : vector<8x128xf32>
      %cst_30 = arith.constant 1.000000e+00 : f32
      %107 = vector.broadcast %cst_30 : f32 to vector<8x128xf32>
      %108 = arith.addf %107, %106 : vector<8x128xf32>
      %109 = arith.divf %107, %108 : vector<8x128xf32>
      %110 = vector.extract_strided_slice %103 {offsets = [0, 128], sizes = [8, 128], strides = [1, 1]} : vector<8x512xf32> to vector<8x128xf32>
      %111 = arith.negf %110 : vector<8x128xf32>
      %112 = math.exp %111 : vector<8x128xf32>
      %cst_31 = arith.constant 1.000000e+00 : f32
      %113 = vector.broadcast %cst_31 : f32 to vector<8x128xf32>
      %114 = arith.addf %113, %112 : vector<8x128xf32>
      %115 = arith.divf %113, %114 : vector<8x128xf32>
      %116 = vector.extract_strided_slice %103 {offsets = [0, 256], sizes = [8, 128], strides = [1, 1]} : vector<8x512xf32> to vector<8x128xf32>
      %117 = math.tanh %116 : vector<8x128xf32>
      %118 = vector.extract_strided_slice %103 {offsets = [0, 384], sizes = [8, 128], strides = [1, 1]} : vector<8x512xf32> to vector<8x128xf32>
      %119 = arith.negf %118 : vector<8x128xf32>
      %120 = math.exp %119 : vector<8x128xf32>
      %cst_32 = arith.constant 1.000000e+00 : f32
      %121 = vector.broadcast %cst_32 : f32 to vector<8x128xf32>
      %122 = arith.addf %121, %120 : vector<8x128xf32>
      %123 = arith.divf %121, %122 : vector<8x128xf32>
      %124 = arith.mulf %115, %94 : vector<8x128xf32>
      %125 = arith.mulf %109, %117 : vector<8x128xf32>
      %126 = arith.addf %124, %125 : vector<8x128xf32>
      %127 = math.tanh %126 : vector<8x128xf32>
      %128 = arith.mulf %123, %127 : vector<8x128xf32>
      %129 = arith.addi %14, %c2_i32 : i32
      %130 = vector.broadcast %129 : i32 to vector<8x128xi32>
      %131 = arith.cmpi slt, %130, %13 : vector<8x128xi32>
      %132 = arith.select %131, %128, %93 : vector<8x128xi1>, vector<8x128xf32>
      %133 = arith.select %131, %126, %94 : vector<8x128xi1>, vector<8x128xf32>
      %c3_i32 = arith.constant 3 : i32
      %134 = arith.index_cast %c3_i32 : i32 to index
      %c0_33 = arith.constant 0 : index
      %c0_34 = arith.constant 0 : index
      %135 = vector.load %arg4[%134, %c0_33, %c0_34] : memref<8x8x128xbf16, #tpu.memory_space<vmem>>, vector<1x8x128xbf16>
      %136 = vector.shape_cast %135 : vector<1x8x128xbf16> to vector<8x128xbf16>
      %137 = arith.extf %136 : vector<8x128xbf16> to vector<8x128xf32>
      %138 = tpu.concatenate %137, %132 in 1 : vector<8x128xf32>, vector<8x128xf32> -> vector<8x256xf32>
      %139 = arith.truncf %138 : vector<8x256xf32> to vector<8x256xbf16>
      %cst_35 = arith.constant dense<0.000000e+00> : vector<8x512xf32>
      %140 = tpu.matmul %139, %11, %cst_35 {dimension_numbers = #tpu.dot_dimension_numbers<[1], [0], [0], [1], [0, 0, 1, 1], [], []>} : vector<8x256xbf16>, vector<256x512xbf16>, vector<8x512xf32> -> vector<8x512xf32>
      %141 = vector.broadcast %12 : vector<1x512xf32> to vector<8x512xf32>
      %142 = arith.addf %140, %141 : vector<8x512xf32>
      %143 = vector.extract_strided_slice %142 {offsets = [0, 0], sizes = [8, 128], strides = [1, 1]} : vector<8x512xf32> to vector<8x128xf32>
      %144 = arith.negf %143 : vector<8x128xf32>
      %145 = math.exp %144 : vector<8x128xf32>
      %cst_36 = arith.constant 1.000000e+00 : f32
      %146 = vector.broadcast %cst_36 : f32 to vector<8x128xf32>
      %147 = arith.addf %146, %145 : vector<8x128xf32>
      %148 = arith.divf %146, %147 : vector<8x128xf32>
      %149 = vector.extract_strided_slice %142 {offsets = [0, 128], sizes = [8, 128], strides = [1, 1]} : vector<8x512xf32> to vector<8x128xf32>
      %150 = arith.negf %149 : vector<8x128xf32>
      %151 = math.exp %150 : vector<8x128xf32>
      %cst_37 = arith.constant 1.000000e+00 : f32
      %152 = vector.broadcast %cst_37 : f32 to vector<8x128xf32>
      %153 = arith.addf %152, %151 : vector<8x128xf32>
      %154 = arith.divf %152, %153 : vector<8x128xf32>
      %155 = vector.extract_strided_slice %142 {offsets = [0, 256], sizes = [8, 128], strides = [1, 1]} : vector<8x512xf32> to vector<8x128xf32>
      %156 = math.tanh %155 : vector<8x128xf32>
      %157 = vector.extract_strided_slice %142 {offsets = [0, 384], sizes = [8, 128], strides = [1, 1]} : vector<8x512xf32> to vector<8x128xf32>
      %158 = arith.negf %157 : vector<8x128xf32>
      %159 = math.exp %158 : vector<8x128xf32>
      %cst_38 = arith.constant 1.000000e+00 : f32
      %160 = vector.broadcast %cst_38 : f32 to vector<8x128xf32>
      %161 = arith.addf %160, %159 : vector<8x128xf32>
      %162 = arith.divf %160, %161 : vector<8x128xf32>
      %163 = arith.mulf %154, %133 : vector<8x128xf32>
      %164 = arith.mulf %148, %156 : vector<8x128xf32>
      %165 = arith.addf %163, %164 : vector<8x128xf32>
      %166 = math.tanh %165 : vector<8x128xf32>
      %167 = arith.mulf %162, %166 : vector<8x128xf32>
      %168 = arith.addi %14, %c3_i32 : i32
      %169 = vector.broadcast %168 : i32 to vector<8x128xi32>
      %170 = arith.cmpi slt, %169, %13 : vector<8x128xi32>
      %171 = arith.select %170, %167, %132 : vector<8x128xi1>, vector<8x128xf32>
      %172 = arith.select %170, %165, %133 : vector<8x128xi1>, vector<8x128xf32>
      %c4_i32 = arith.constant 4 : i32
      %173 = arith.index_cast %c4_i32 : i32 to index
      %c0_39 = arith.constant 0 : index
      %c0_40 = arith.constant 0 : index
      %174 = vector.load %arg4[%173, %c0_39, %c0_40] : memref<8x8x128xbf16, #tpu.memory_space<vmem>>, vector<1x8x128xbf16>
      %175 = vector.shape_cast %174 : vector<1x8x128xbf16> to vector<8x128xbf16>
      %176 = arith.extf %175 : vector<8x128xbf16> to vector<8x128xf32>
      %177 = tpu.concatenate %176, %171 in 1 : vector<8x128xf32>, vector<8x128xf32> -> vector<8x256xf32>
      %178 = arith.truncf %177 : vector<8x256xf32> to vector<8x256xbf16>
      %cst_41 = arith.constant dense<0.000000e+00> : vector<8x512xf32>
      %179 = tpu.matmul %178, %11, %cst_41 {dimension_numbers = #tpu.dot_dimension_numbers<[1], [0], [0], [1], [0, 0, 1, 1], [], []>} : vector<8x256xbf16>, vector<256x512xbf16>, vector<8x512xf32> -> vector<8x512xf32>
      %180 = vector.broadcast %12 : vector<1x512xf32> to vector<8x512xf32>
      %181 = arith.addf %179, %180 : vector<8x512xf32>
      %182 = vector.extract_strided_slice %181 {offsets = [0, 0], sizes = [8, 128], strides = [1, 1]} : vector<8x512xf32> to vector<8x128xf32>
      %183 = arith.negf %182 : vector<8x128xf32>
      %184 = math.exp %183 : vector<8x128xf32>
      %cst_42 = arith.constant 1.000000e+00 : f32
      %185 = vector.broadcast %cst_42 : f32 to vector<8x128xf32>
      %186 = arith.addf %185, %184 : vector<8x128xf32>
      %187 = arith.divf %185, %186 : vector<8x128xf32>
      %188 = vector.extract_strided_slice %181 {offsets = [0, 128], sizes = [8, 128], strides = [1, 1]} : vector<8x512xf32> to vector<8x128xf32>
      %189 = arith.negf %188 : vector<8x128xf32>
      %190 = math.exp %189 : vector<8x128xf32>
      %cst_43 = arith.constant 1.000000e+00 : f32
      %191 = vector.broadcast %cst_43 : f32 to vector<8x128xf32>
      %192 = arith.addf %191, %190 : vector<8x128xf32>
      %193 = arith.divf %191, %192 : vector<8x128xf32>
      %194 = vector.extract_strided_slice %181 {offsets = [0, 256], sizes = [8, 128], strides = [1, 1]} : vector<8x512xf32> to vector<8x128xf32>
      %195 = math.tanh %194 : vector<8x128xf32>
      %196 = vector.extract_strided_slice %181 {offsets = [0, 384], sizes = [8, 128], strides = [1, 1]} : vector<8x512xf32> to vector<8x128xf32>
      %197 = arith.negf %196 : vector<8x128xf32>
      %198 = math.exp %197 : vector<8x128xf32>
      %cst_44 = arith.constant 1.000000e+00 : f32
      %199 = vector.broadcast %cst_44 : f32 to vector<8x128xf32>
      %200 = arith.addf %199, %198 : vector<8x128xf32>
      %201 = arith.divf %199, %200 : vector<8x128xf32>
      %202 = arith.mulf %193, %172 : vector<8x128xf32>
      %203 = arith.mulf %187, %195 : vector<8x128xf32>
      %204 = arith.addf %202, %203 : vector<8x128xf32>
      %205 = math.tanh %204 : vector<8x128xf32>
      %206 = arith.mulf %201, %205 : vector<8x128xf32>
      %207 = arith.addi %14, %c4_i32 : i32
      %208 = vector.broadcast %207 : i32 to vector<8x128xi32>
      %209 = arith.cmpi slt, %208, %13 : vector<8x128xi32>
      %210 = arith.select %209, %206, %171 : vector<8x128xi1>, vector<8x128xf32>
      %211 = arith.select %209, %204, %172 : vector<8x128xi1>, vector<8x128xf32>
      %c5_i32 = arith.constant 5 : i32
      %212 = arith.index_cast %c5_i32 : i32 to index
      %c0_45 = arith.constant 0 : index
      %c0_46 = arith.constant 0 : index
      %213 = vector.load %arg4[%212, %c0_45, %c0_46] : memref<8x8x128xbf16, #tpu.memory_space<vmem>>, vector<1x8x128xbf16>
      %214 = vector.shape_cast %213 : vector<1x8x128xbf16> to vector<8x128xbf16>
      %215 = arith.extf %214 : vector<8x128xbf16> to vector<8x128xf32>
      %216 = tpu.concatenate %215, %210 in 1 : vector<8x128xf32>, vector<8x128xf32> -> vector<8x256xf32>
      %217 = arith.truncf %216 : vector<8x256xf32> to vector<8x256xbf16>
      %cst_47 = arith.constant dense<0.000000e+00> : vector<8x512xf32>
      %218 = tpu.matmul %217, %11, %cst_47 {dimension_numbers = #tpu.dot_dimension_numbers<[1], [0], [0], [1], [0, 0, 1, 1], [], []>} : vector<8x256xbf16>, vector<256x512xbf16>, vector<8x512xf32> -> vector<8x512xf32>
      %219 = vector.broadcast %12 : vector<1x512xf32> to vector<8x512xf32>
      %220 = arith.addf %218, %219 : vector<8x512xf32>
      %221 = vector.extract_strided_slice %220 {offsets = [0, 0], sizes = [8, 128], strides = [1, 1]} : vector<8x512xf32> to vector<8x128xf32>
      %222 = arith.negf %221 : vector<8x128xf32>
      %223 = math.exp %222 : vector<8x128xf32>
      %cst_48 = arith.constant 1.000000e+00 : f32
      %224 = vector.broadcast %cst_48 : f32 to vector<8x128xf32>
      %225 = arith.addf %224, %223 : vector<8x128xf32>
      %226 = arith.divf %224, %225 : vector<8x128xf32>
      %227 = vector.extract_strided_slice %220 {offsets = [0, 128], sizes = [8, 128], strides = [1, 1]} : vector<8x512xf32> to vector<8x128xf32>
      %228 = arith.negf %227 : vector<8x128xf32>
      %229 = math.exp %228 : vector<8x128xf32>
      %cst_49 = arith.constant 1.000000e+00 : f32
      %230 = vector.broadcast %cst_49 : f32 to vector<8x128xf32>
      %231 = arith.addf %230, %229 : vector<8x128xf32>
      %232 = arith.divf %230, %231 : vector<8x128xf32>
      %233 = vector.extract_strided_slice %220 {offsets = [0, 256], sizes = [8, 128], strides = [1, 1]} : vector<8x512xf32> to vector<8x128xf32>
      %234 = math.tanh %233 : vector<8x128xf32>
      %235 = vector.extract_strided_slice %220 {offsets = [0, 384], sizes = [8, 128], strides = [1, 1]} : vector<8x512xf32> to vector<8x128xf32>
      %236 = arith.negf %235 : vector<8x128xf32>
      %237 = math.exp %236 : vector<8x128xf32>
      %cst_50 = arith.constant 1.000000e+00 : f32
      %238 = vector.broadcast %cst_50 : f32 to vector<8x128xf32>
      %239 = arith.addf %238, %237 : vector<8x128xf32>
      %240 = arith.divf %238, %239 : vector<8x128xf32>
      %241 = arith.mulf %232, %211 : vector<8x128xf32>
      %242 = arith.mulf %226, %234 : vector<8x128xf32>
      %243 = arith.addf %241, %242 : vector<8x128xf32>
      %244 = math.tanh %243 : vector<8x128xf32>
      %245 = arith.mulf %240, %244 : vector<8x128xf32>
      %246 = arith.addi %14, %c5_i32 : i32
      %247 = vector.broadcast %246 : i32 to vector<8x128xi32>
      %248 = arith.cmpi slt, %247, %13 : vector<8x128xi32>
      %249 = arith.select %248, %245, %210 : vector<8x128xi1>, vector<8x128xf32>
      %250 = arith.select %248, %243, %211 : vector<8x128xi1>, vector<8x128xf32>
      %c6_i32 = arith.constant 6 : i32
      %251 = arith.index_cast %c6_i32 : i32 to index
      %c0_51 = arith.constant 0 : index
      %c0_52 = arith.constant 0 : index
      %252 = vector.load %arg4[%251, %c0_51, %c0_52] : memref<8x8x128xbf16, #tpu.memory_space<vmem>>, vector<1x8x128xbf16>
      %253 = vector.shape_cast %252 : vector<1x8x128xbf16> to vector<8x128xbf16>
      %254 = arith.extf %253 : vector<8x128xbf16> to vector<8x128xf32>
      %255 = tpu.concatenate %254, %249 in 1 : vector<8x128xf32>, vector<8x128xf32> -> vector<8x256xf32>
      %256 = arith.truncf %255 : vector<8x256xf32> to vector<8x256xbf16>
      %cst_53 = arith.constant dense<0.000000e+00> : vector<8x512xf32>
      %257 = tpu.matmul %256, %11, %cst_53 {dimension_numbers = #tpu.dot_dimension_numbers<[1], [0], [0], [1], [0, 0, 1, 1], [], []>} : vector<8x256xbf16>, vector<256x512xbf16>, vector<8x512xf32> -> vector<8x512xf32>
      %258 = vector.broadcast %12 : vector<1x512xf32> to vector<8x512xf32>
      %259 = arith.addf %257, %258 : vector<8x512xf32>
      %260 = vector.extract_strided_slice %259 {offsets = [0, 0], sizes = [8, 128], strides = [1, 1]} : vector<8x512xf32> to vector<8x128xf32>
      %261 = arith.negf %260 : vector<8x128xf32>
      %262 = math.exp %261 : vector<8x128xf32>
      %cst_54 = arith.constant 1.000000e+00 : f32
      %263 = vector.broadcast %cst_54 : f32 to vector<8x128xf32>
      %264 = arith.addf %263, %262 : vector<8x128xf32>
      %265 = arith.divf %263, %264 : vector<8x128xf32>
      %266 = vector.extract_strided_slice %259 {offsets = [0, 128], sizes = [8, 128], strides = [1, 1]} : vector<8x512xf32> to vector<8x128xf32>
      %267 = arith.negf %266 : vector<8x128xf32>
      %268 = math.exp %267 : vector<8x128xf32>
      %cst_55 = arith.constant 1.000000e+00 : f32
      %269 = vector.broadcast %cst_55 : f32 to vector<8x128xf32>
      %270 = arith.addf %269, %268 : vector<8x128xf32>
      %271 = arith.divf %269, %270 : vector<8x128xf32>
      %272 = vector.extract_strided_slice %259 {offsets = [0, 256], sizes = [8, 128], strides = [1, 1]} : vector<8x512xf32> to vector<8x128xf32>
      %273 = math.tanh %272 : vector<8x128xf32>
      %274 = vector.extract_strided_slice %259 {offsets = [0, 384], sizes = [8, 128], strides = [1, 1]} : vector<8x512xf32> to vector<8x128xf32>
      %275 = arith.negf %274 : vector<8x128xf32>
      %276 = math.exp %275 : vector<8x128xf32>
      %cst_56 = arith.constant 1.000000e+00 : f32
      %277 = vector.broadcast %cst_56 : f32 to vector<8x128xf32>
      %278 = arith.addf %277, %276 : vector<8x128xf32>
      %279 = arith.divf %277, %278 : vector<8x128xf32>
      %280 = arith.mulf %271, %250 : vector<8x128xf32>
      %281 = arith.mulf %265, %273 : vector<8x128xf32>
      %282 = arith.addf %280, %281 : vector<8x128xf32>
      %283 = math.tanh %282 : vector<8x128xf32>
      %284 = arith.mulf %279, %283 : vector<8x128xf32>
      %285 = arith.addi %14, %c6_i32 : i32
      %286 = vector.broadcast %285 : i32 to vector<8x128xi32>
      %287 = arith.cmpi slt, %286, %13 : vector<8x128xi32>
      %288 = arith.select %287, %284, %249 : vector<8x128xi1>, vector<8x128xf32>
      %289 = arith.select %287, %282, %250 : vector<8x128xi1>, vector<8x128xf32>
      %c7_i32 = arith.constant 7 : i32
      %290 = arith.index_cast %c7_i32 : i32 to index
      %c0_57 = arith.constant 0 : index
      %c0_58 = arith.constant 0 : index
      %291 = vector.load %arg4[%290, %c0_57, %c0_58] : memref<8x8x128xbf16, #tpu.memory_space<vmem>>, vector<1x8x128xbf16>
      %292 = vector.shape_cast %291 : vector<1x8x128xbf16> to vector<8x128xbf16>
      %293 = arith.extf %292 : vector<8x128xbf16> to vector<8x128xf32>
      %294 = tpu.concatenate %293, %288 in 1 : vector<8x128xf32>, vector<8x128xf32> -> vector<8x256xf32>
      %295 = arith.truncf %294 : vector<8x256xf32> to vector<8x256xbf16>
      %cst_59 = arith.constant dense<0.000000e+00> : vector<8x512xf32>
      %296 = tpu.matmul %295, %11, %cst_59 {dimension_numbers = #tpu.dot_dimension_numbers<[1], [0], [0], [1], [0, 0, 1, 1], [], []>} : vector<8x256xbf16>, vector<256x512xbf16>, vector<8x512xf32> -> vector<8x512xf32>
      %297 = vector.broadcast %12 : vector<1x512xf32> to vector<8x512xf32>
      %298 = arith.addf %296, %297 : vector<8x512xf32>
      %299 = vector.extract_strided_slice %298 {offsets = [0, 0], sizes = [8, 128], strides = [1, 1]} : vector<8x512xf32> to vector<8x128xf32>
      %300 = arith.negf %299 : vector<8x128xf32>
      %301 = math.exp %300 : vector<8x128xf32>
      %cst_60 = arith.constant 1.000000e+00 : f32
      %302 = vector.broadcast %cst_60 : f32 to vector<8x128xf32>
      %303 = arith.addf %302, %301 : vector<8x128xf32>
      %304 = arith.divf %302, %303 : vector<8x128xf32>
      %305 = vector.extract_strided_slice %298 {offsets = [0, 128], sizes = [8, 128], strides = [1, 1]} : vector<8x512xf32> to vector<8x128xf32>
      %306 = arith.negf %305 : vector<8x128xf32>
      %307 = math.exp %306 : vector<8x128xf32>
      %cst_61 = arith.constant 1.000000e+00 : f32
      %308 = vector.broadcast %cst_61 : f32 to vector<8x128xf32>
      %309 = arith.addf %308, %307 : vector<8x128xf32>
      %310 = arith.divf %308, %309 : vector<8x128xf32>
      %311 = vector.extract_strided_slice %298 {offsets = [0, 256], sizes = [8, 128], strides = [1, 1]} : vector<8x512xf32> to vector<8x128xf32>
      %312 = math.tanh %311 : vector<8x128xf32>
      %313 = vector.extract_strided_slice %298 {offsets = [0, 384], sizes = [8, 128], strides = [1, 1]} : vector<8x512xf32> to vector<8x128xf32>
      %314 = arith.negf %313 : vector<8x128xf32>
      %315 = math.exp %314 : vector<8x128xf32>
      %cst_62 = arith.constant 1.000000e+00 : f32
      %316 = vector.broadcast %cst_62 : f32 to vector<8x128xf32>
      %317 = arith.addf %316, %315 : vector<8x128xf32>
      %318 = arith.divf %316, %317 : vector<8x128xf32>
      %319 = arith.mulf %310, %289 : vector<8x128xf32>
      %320 = arith.mulf %304, %312 : vector<8x128xf32>
      %321 = arith.addf %319, %320 : vector<8x128xf32>
      %322 = math.tanh %321 : vector<8x128xf32>
      %323 = arith.mulf %318, %322 : vector<8x128xf32>
      %324 = arith.addi %14, %c7_i32 : i32
      %325 = vector.broadcast %324 : i32 to vector<8x128xi32>
      %326 = arith.cmpi slt, %325, %13 : vector<8x128xi32>
      %327 = arith.select %326, %323, %288 : vector<8x128xi1>, vector<8x128xf32>
      %328 = arith.select %326, %321, %289 : vector<8x128xi1>, vector<8x128xf32>
      %c8_i32_63 = arith.constant 8 : i32
      %c0_64 = arith.constant 0 : index
      %c0_65 = arith.constant 0 : index
      %329 = vector.load %arg10[%c0_64, %c0_65] : memref<8x128xf32, #tpu.memory_space<vmem>>, vector<8x128xf32>
      tpu.vector_store %arg10[%c0_64, %c0_65], %327 {strides = array<i32>} : memref<8x128xf32, #tpu.memory_space<vmem>>, vector<8x128xf32>,
      %c0_66 = arith.constant 0 : index
      %c0_67 = arith.constant 0 : index
      %330 = vector.load %arg11[%c0_66, %c0_67] : memref<8x128xf32, #tpu.memory_space<vmem>>, vector<8x128xf32>
      tpu.vector_store %arg11[%c0_66, %c0_67], %328 {strides = array<i32>} : memref<8x128xf32, #tpu.memory_space<vmem>>, vector<8x128xf32>,
    } else {
    }
    %c0_i32_2 = arith.constant 0 : i32
    %8 = arith.cmpi eq, %arg1, %c0_i32_2 : i32
    %9 = arith.extui %8 : i1 to i32
    %c0_i32_3 = arith.constant 0 : i32
    %10 = arith.cmpi ne, %9, %c0_i32_3 : i32
    scf.if %10 {
      %c0_4 = arith.constant 0 : index
      %c0_5 = arith.constant 0 : index
      %11 = vector.load %arg10[%c0_4, %c0_5] : memref<8x128xf32, #tpu.memory_space<vmem>>, vector<8x128xf32>
      %12 = arith.truncf %11 : vector<8x128xf32> to vector<8x128xbf16>
      %c0_6 = arith.constant 0 : index
      %c0_7 = arith.constant 0 : index
      %13 = vector.load %arg7[%c0_6, %c0_7] : memref<128x128xbf16, #tpu.memory_space<vmem>>, vector<128x128xbf16>
      %cst = arith.constant dense<0.000000e+00> : vector<8x128xf32>
      %14 = tpu.matmul %12, %13, %cst {dimension_numbers = #tpu.dot_dimension_numbers<[1], [0], [0], [1], [0, 0, 1, 1], [], []>} : vector<8x128xbf16>, vector<128x128xbf16>, vector<8x128xf32> -> vector<8x128xf32>
      %c0_8 = arith.constant 0 : index
      %c0_9 = arith.constant 0 : index
      %15 = vector.load %arg8[%c0_8, %c0_9] : memref<1x128xf32, #tpu.memory_space<vmem>>, vector<1x128xf32>
      %16 = vector.broadcast %15 : vector<1x128xf32> to vector<8x128xf32>
      %17 = arith.addf %14, %16 : vector<8x128xf32>
      %c0_10 = arith.constant 0 : index
      %c0_11 = arith.constant 0 : index
      %18 = vector.load %arg9[%c0_10, %c0_11] : memref<8x128xf32, #tpu.memory_space<vmem>>, vector<8x128xf32>
      tpu.vector_store %arg9[%c0_10, %c0_11], %17 {strides = array<i32>} : memref<8x128xf32, #tpu.memory_space<vmem>>, vector<8x128xf32>,
    } else {
    }
    return
  }
  func.func @transform_0(%arg0: i32, %arg1: i32, %arg2: memref<2xi32, #tpu.memory_space<smem>>) -> (i32, i32) {
    %c0_i32 = arith.constant 0 : i32
    %c0_i32_0 = arith.constant 0 : i32
    return %arg0, %c0_i32 : i32, i32
  }
  func.func @transform_1(%arg0: i32, %arg1: i32, %arg2: memref<2xi32, #tpu.memory_space<smem>>) -> (i32, i32, i32) {
    %c1 = arith.constant 1 : index
    %0 = memref.load %arg2[%c1] : memref<2xi32, #tpu.memory_space<smem>>
    %1 = arith.minsi %arg1, %0 : i32
    %c0_i32 = arith.constant 0 : i32
    %c0_i32_0 = arith.constant 0 : i32
    return %1, %arg0, %c0_i32 : i32, i32, i32
  }
  func.func @transform_2(%arg0: i32, %arg1: i32, %arg2: memref<2xi32, #tpu.memory_space<smem>>) -> (i32, i32) {
    %c0_i32 = arith.constant 0 : i32
    %c0_i32_0 = arith.constant 0 : i32
    %c0_i32_1 = arith.constant 0 : i32
    return %c0_i32, %c0_i32_0 : i32, i32
  }
  func.func @transform_3(%arg0: i32, %arg1: i32, %arg2: memref<2xi32, #tpu.memory_space<smem>>) -> (i32, i32) {
    %c0_i32 = arith.constant 0 : i32
    %c0_i32_0 = arith.constant 0 : i32
    %c0_i32_1 = arith.constant 0 : i32
    return %c0_i32, %c0_i32_0 : i32, i32
  }
  func.func @transform_4(%arg0: i32, %arg1: i32, %arg2: memref<2xi32, #tpu.memory_space<smem>>) -> (i32, i32) {
    %c0_i32 = arith.constant 0 : i32
    %c0_i32_0 = arith.constant 0 : i32
    %c0_i32_1 = arith.constant 0 : i32
    return %c0_i32, %c0_i32_0 : i32, i32
  }
  func.func @transform_5(%arg0: i32, %arg1: i32, %arg2: memref<2xi32, #tpu.memory_space<smem>>) -> (i32, i32) {
    %c0_i32 = arith.constant 0 : i32
    %c0_i32_0 = arith.constant 0 : i32
    %c0_i32_1 = arith.constant 0 : i32
    return %c0_i32, %c0_i32_0 : i32, i32
  }
  func.func @transform_6(%arg0: i32, %arg1: i32, %arg2: memref<2xi32, #tpu.memory_space<smem>>) -> (i32, i32) {
    %c0_i32 = arith.constant 0 : i32
    %c0_i32_0 = arith.constant 0 : i32
    return %arg0, %c0_i32 : i32, i32
  }
}

</mosaic_0001>

<llo_original>
// kernel: tpu_custom_call.1
$region0: #{tpu_custom_call.1}
  #allocation0 [shape = 'u32[]', space=smem, size = 0x4, offset = 0x4, fixed_abs, tag = 'smem constant byte address 0x4 - core index']
  #allocation1 [shape = 'u32[144,128]{1,0:T(1,128)}', space=vmem, size = 0x12000, scoped, tag = 'internal scratch']
  #allocation2 [shape = 'f32[8,128]{1,0:T(8,128)}', space=vmem, size = 0x1000, scoped, tag = 'scratch operand']
  #allocation3 [shape = 'f32[8,128]{1,0:T(8,128)}', space=vmem, size = 0x1000, scoped, tag = 'scratch operand']
  #allocation4 [shape = 's32[1]{0}', space=sflag, size = 0x4, scoped, tag = 'scoped memory for tpu_custom_call.1']
  #allocation5 [shape = 'u8[512]{0}', space=smem, size = 0x200, scoped, tag = 'prefetched SMEM operand 0']
  %s0 = inlined_call_operand.hbm [shape: s32[2], index: 0, kind: input, shape index: {}]
  %s1 = inlined_call_operand.hbm [shape: s32[8,128], index: 1, kind: input, shape index: {}]
  %s2 = inlined_call_operand.hbm [shape: bf16[8,8,128], index: 2, kind: input, shape index: {}]
  %s3 = inlined_call_operand.hbm [shape: bf16[256,512], index: 3, kind: input, shape index: {}]
  %s4 = inlined_call_operand.vmem [shape: f32[1,512], index: 4, kind: input, shape index: {}]
  %s5 = inlined_call_operand.hbm [shape: bf16[128,128], index: 5, kind: input, shape index: {}]
  %s6 = inlined_call_operand.vmem [shape: f32[1,128], index: 6, kind: input, shape index: {}]
  %s7 = inlined_call_operand.hbm [shape: f32[8,128], index: 7, kind: output, shape index: {}]
  %s8 = sld [smem:[#allocation0]]
  $region62: #{tpu_custom_call.1} parent=0
    _
  %s10 = ssub.s32 1, %s8
  %s11 = scalar_select 0, %s10, %s8
  %13 = dma.hbm_to_smem %s0, 16, [#allocation5], [#allocation4]
  %14 = dma.done [#allocation4], 16
  %15 = sfence
  $region1: #{tpu_custom_call.1} parent=0
    #allocation6 [shape = 'u8[4096]{0}', space=vmem, size = 0x1000, scoped, tag = 'input window, operand 1, single buffered']
    #allocation7 [shape = 's32[1]{0}', space=sflag, size = 0x4, scoped, tag = 'scoped memory for tpu_custom_call.1']
    #allocation8 [shape = 's32[1]{0}', space=sflag, size = 0x4, scoped, tag = 'scoped memory for tpu_custom_call.1']
    #allocation9 [shape = 'u8[16384]{0}', space=vmem, size = 0x4000, scoped, tag = 'input window, operand 2, single buffered']
    #allocation10 [shape = 's32[1]{0}', space=sflag, size = 0x4, scoped, tag = 'scoped memory for tpu_custom_call.1']
    #allocation11 [shape = 'u8[262144]{0}', space=vmem, size = 0x40000, scoped, tag = 'input window, operand 3, single buffered']
    #allocation12 [shape = 'u8[32768]{0}', space=vmem, size = 0x8000, scoped, tag = 'input window, operand 5, single buffered']
    #allocation13 [shape = 's32[1]{0}', space=sflag, size = 0x4, scoped, tag = 'scoped memory for tpu_custom_call.1']
    #allocation14 [shape = 'u8[4096]{0}', space=vmem, size = 0x1000, scoped, tag = 'output window, operand 0, single buffered']
    %16 = vsyncpa [#allocation7], 0
    %17 = vsyncpa [#allocation10], 0
    %18 = vsyncpa [#allocation13], 0
    %19 = vsyncpa [#allocation8], 0
    // Predicated region
    $region2: #{tpu_custom_call.1} parent=1 // pred_check
      _
    $region3: #{tpu_custom_call.1} parent=1 // pred_check_branch
      %21 = sbr.rel (0) target = $region5
    $region4: #{tpu_custom_call.1} parent=1 // pred_region
      %s23 = ssub.s32 128, 128
      %24 = vsyncadd [#allocation7], %s23
      %s26 = sshll.u32 [#allocation6], 4
      %s27 = int_to_ptr.vmem [resolvable:$true] %s26
      %29 = dma.hbm_to_vmem [thread:$0]  %s1, 128, %s27, [#allocation7]
    $region5: #{tpu_custom_call.1} parent=1 // pred_fallthru
      _
    // Predicated region
    $region6: #{tpu_custom_call.1} parent=1 // pred_check
      _
    $region7: #{tpu_custom_call.1} parent=1 // pred_check_branch
      %31 = sbr.rel (0) target = $region9
    $region8: #{tpu_custom_call.1} parent=1 // pred_region
      %s32 = sld [smem:[#allocation5 + $0x1]]
      %p33 = scmp.lt.s32.totalorder 0, %s32
      %s34 = scalar_select %p33, 0, %s32
      %s35 = smul.u32 8, %s34
      %s37 = ssub.s32 512, 512
      %38 = vsyncadd [#allocation10], %s37
      %s39 = smul.addr %s35, 64
      %s40 = scalar_lea.hbm %s2, %s39
      %s41 = sshll.u32 [#allocation9], 4
      %s42 = int_to_ptr.vmem [resolvable:$true] %s41
      %47 = dma.hbm_to_vmem [thread:$0]  %s40, 512, %s42, [#allocation10], 64, 64, 4
    $region9: #{tpu_custom_call.1} parent=1 // pred_fallthru
      _
    // Predicated region
    $region10: #{tpu_custom_call.1} parent=1 // pred_check
      _
    $region11: #{tpu_custom_call.1} parent=1 // pred_check_branch
      %49 = sbr.rel (0) target = $region13
    $region12: #{tpu_custom_call.1} parent=1 // pred_region
      %s51 = ssub.s32 8192, 8192
      %52 = vsyncadd [#allocation10], %s51
      %s53 = sshll.u32 [#allocation11], 4
      %s54 = int_to_ptr.vmem [resolvable:$true] %s53
      %59 = dma.hbm_to_vmem [thread:$0]  %s3, 8192, %s54, [#allocation10], 256, 256, 16
    $region13: #{tpu_custom_call.1} parent=1 // pred_fallthru
      _
    // Predicated region
    $region14: #{tpu_custom_call.1} parent=1 // pred_check
      _
    $region15: #{tpu_custom_call.1} parent=1 // pred_check_branch
      %61 = sbr.rel (0) target = $region17
    $region16: #{tpu_custom_call.1} parent=1 // pred_region
      _
    $region17: #{tpu_custom_call.1} parent=1 // pred_fallthru
      _
    // Predicated region
    $region18: #{tpu_custom_call.1} parent=1 // pred_check
      _
    $region19: #{tpu_custom_call.1} parent=1 // pred_check_branch
      %63 = sbr.rel (0) target = $region21
    $region20: #{tpu_custom_call.1} parent=1 // pred_region
      %s65 = ssub.s32 1024, 1024
      %66 = vsyncadd [#allocation13], %s65
      %s67 = sshll.u32 [#allocation12], 4
      %s68 = int_to_ptr.vmem [resolvable:$true] %s67
      %73 = dma.hbm_to_vmem [thread:$0]  %s5, 1024, %s68, [#allocation13], 64, 64, 4
    $region21: #{tpu_custom_call.1} parent=1 // pred_fallthru
      _
    // Predicated region
    $region22: #{tpu_custom_call.1} parent=1 // pred_check
      _
    $region23: #{tpu_custom_call.1} parent=1 // pred_check_branch
      %75 = sbr.rel (0) target = $region25
    $region24: #{tpu_custom_call.1} parent=1 // pred_region
      _
    $region25: #{tpu_custom_call.1} parent=1 // pred_fallthru
      _
    // Predicated region
    $region26: #{tpu_custom_call.1} parent=1 // pred_check
      _
    $region27: #{tpu_custom_call.1} parent=1 // pred_check_branch
      %77 = sbr.rel (0) target = $region29
    $region28: #{tpu_custom_call.1} parent=1 // pred_region
      %78 = dma.done [#allocation7], 128
    $region29: #{tpu_custom_call.1} parent=1 // pred_fallthru
      _
    // Predicated region
    $region30: #{tpu_custom_call.1} parent=1 // pred_check
      _
    $region31: #{tpu_custom_call.1} parent=1 // pred_check_branch
      %80 = sbr.rel (0) target = $region33
    $region32: #{tpu_custom_call.1} parent=1 // pred_region
      %81 = dma.done [#allocation10], 512
    $region33: #{tpu_custom_call.1} parent=1 // pred_fallthru
      _
    // Predicated region
    $region34: #{tpu_custom_call.1} parent=1 // pred_check
      _
    $region35: #{tpu_custom_call.1} parent=1 // pred_check_branch
      %83 = sbr.rel (0) target = $region37
    $region36: #{tpu_custom_call.1} parent=1 // pred_region
      %84 = dma.done [#allocation10], 8192
    $region37: #{tpu_custom_call.1} parent=1 // pred_fallthru
      _
    // Predicated region
    $region38: #{tpu_custom_call.1} parent=1 // pred_check
      _
    $region39: #{tpu_custom_call.1} parent=1 // pred_check_branch
      %86 = sbr.rel (0) target = $region41
    $region40: #{tpu_custom_call.1} parent=1 // pred_region
      %87 = dma.done [#allocation13], 1024
    $region41: #{tpu_custom_call.1} parent=1 // pred_fallthru
      _
    %s88 = sld [smem:[#allocation5 + $0x1]]
    %p89 = scmp.lt.s32.totalorder 0, %s88
    %s90 = scalar_select %p89, 0, %s88
    %s91 = smul.u32 8, %s90
    %p93 = scmp.eq.s32.totalorder 0, 0
    // Predicated region
    $region42: #{tpu_custom_call.1} parent=1 // pred_check
      %p94 = pneg %p93
    $region43: #{tpu_custom_call.1} parent=1 // pred_check_branch
      %96 = sbr.rel (%p94) target = $region45
    $region44: #{tpu_custom_call.1} parent=1 // pred_region
      %97 = vst [vmem:[#allocation2] sm:$0xff] 0.0
      %98 = vst [vmem:[#allocation3] sm:$0xff] 0.0
    $region45: #{tpu_custom_call.1} parent=1 // pred_fallthru
      _
    %s99 = sld [smem:[#allocation5]]
    %s100 = smul.u32 0, 8
    %p101 = scmp.lt.s32.totalorder %s100, %s99
    // Predicated region
    $region46: #{tpu_custom_call.1} parent=1 // pred_check
      %p102 = pneg %p101
    $region47: #{tpu_custom_call.1} parent=1 // pred_check_branch
      %104 = sbr.rel (%p102) target = $region49
    $region48: #{tpu_custom_call.1} parent=1 // pred_region
      %v105 = vld [vmem:[#allocation11] sm:$0xff]
      %v106 = vld [vmem:[#allocation11 + $0x8] sm:$0xff]
      %v107 = vld [vmem:[#allocation11 + $0x10] sm:$0xff]
      %v108 = vld [vmem:[#allocation11 + $0x18] sm:$0xff]
      %v109 = vld [vmem:[#allocation11 + $0x20] sm:$0xff]
      %v110 = vld [vmem:[#allocation11 + $0x28] sm:$0xff]
      %v111 = vld [vmem:[#allocation11 + $0x30] sm:$0xff]
      %v112 = vld [vmem:[#allocation11 + $0x38] sm:$0xff]
      %v113 = vld [vmem:[#allocation11 + $0x40] sm:$0xff]
      %v114 = vld [vmem:[#allocation11 + $0x48] sm:$0xff]
      %v115 = vld [vmem:[#allocation11 + $0x50] sm:$0xff]
      %v116 = vld [vmem:[#allocation11 + $0x58] sm:$0xff]
      %v117 = vld [vmem:[#allocation11 + $0x60] sm:$0xff]
      %v118 = vld [vmem:[#allocation11 + $0x68] sm:$0xff]
      %v119 = vld [vmem:[#allocation11 + $0x70] sm:$0xff]
      %v120 = vld [vmem:[#allocation11 + $0x78] sm:$0xff]
      %v121 = vld [vmem:[#allocation11 + $0x80] sm:$0xff]
      %v122 = vld [vmem:[#allocation11 + $0x88] sm:$0xff]
      %v123 = vld [vmem:[#allocation11 + $0x90] sm:$0xff]
      %v124 = vld [vmem:[#allocation11 + $0x98] sm:$0xff]
      %v125 = vld [vmem:[#allocation11 + $0xa0] sm:$0xff]
      %v126 = vld [vmem:[#allocation11 + $0xa8] sm:$0xff]
      %v127 = vld [vmem:[#allocation11 + $0xb0] sm:$0xff]
      %v128 = vld [vmem:[#allocation11 + $0xb8] sm:$0xff]
      %v129 = vld [vmem:[#allocation11 + $0xc0] sm:$0xff]
      %v130 = vld [vmem:[#allocation11 + $0xc8] sm:$0xff]
      %v131 = vld [vmem:[#allocation11 + $0xd0] sm:$0xff]
      %v132 = vld [vmem:[#allocation11 + $0xd8] sm:$0xff]
      %v133 = vld [vmem:[#allocation11 + $0xe0] sm:$0xff]
      %v134 = vld [vmem:[#allocation11 + $0xe8] sm:$0xff]
      %v135 = vld [vmem:[#allocation11 + $0xf0] sm:$0xff]
      %v136 = vld [vmem:[#allocation11 + $0xf8] sm:$0xff]
      %v137 = vld [vmem:[#allocation11 + $0x100] sm:$0xff]
      %v138 = vld [vmem:[#allocation11 + $0x108] sm:$0xff]
      %v139 = vld [vmem:[#allocation11 + $0x110] sm:$0xff]
      %v140 = vld [vmem:[#allocation11 + $0x118] sm:$0xff]
      %v141 = vld [vmem:[#allocation11 + $0x120] sm:$0xff]
      %v142 = vld [vmem:[#allocation11 + $0x128] sm:$0xff]
      %v143 = vld [vmem:[#allocation11 + $0x130] sm:$0xff]
      %v144 = vld [vmem:[#allocation11 + $0x138] sm:$0xff]
      %v145 = vld [vmem:[#allocation11 + $0x140] sm:$0xff]
      %v146 = vld [vmem:[#allocation11 + $0x148] sm:$0xff]
      %v147 = vld [vmem:[#allocation11 + $0x150] sm:$0xff]
      %v148 = vld [vmem:[#allocation11 + $0x158] sm:$0xff]
      %v149 = vld [vmem:[#allocation11 + $0x160] sm:$0xff]
      %v150 = vld [vmem:[#allocation11 + $0x168] sm:$0xff]
      %v151 = vld [vmem:[#allocation11 + $0x170] sm:$0xff]
      %v152 = vld [vmem:[#allocation11 + $0x178] sm:$0xff]
      %v153 = vld [vmem:[#allocation11 + $0x180] sm:$0xff]
      %v154 = vld [vmem:[#allocation11 + $0x188] sm:$0xff]
      %v155 = vld [vmem:[#allocation11 + $0x190] sm:$0xff]
      %v156 = vld [vmem:[#allocation11 + $0x198] sm:$0xff]
      %v157 = vld [vmem:[#allocation11 + $0x1a0] sm:$0xff]
      %v158 = vld [vmem:[#allocation11 + $0x1a8] sm:$0xff]
      %v159 = vld [vmem:[#allocation11 + $0x1b0] sm:$0xff]
      %v160 = vld [vmem:[#allocation11 + $0x1b8] sm:$0xff]
      %v161 = vld [vmem:[#allocation11 + $0x1c0] sm:$0xff]
      %v162 = vld [vmem:[#allocation11 + $0x1c8] sm:$0xff]
      %v163 = vld [vmem:[#allocation11 + $0x1d0] sm:$0xff]
      %v164 = vld [vmem:[#allocation11 + $0x1d8] sm:$0xff]
      %v165 = vld [vmem:[#allocation11 + $0x1e0] sm:$0xff]
      %v166 = vld [vmem:[#allocation11 + $0x1e8] sm:$0xff]
      %v167 = vld [vmem:[#allocation11 + $0x1f0] sm:$0xff]
      %v168 = vld [vmem:[#allocation11 + $0x1f8] sm:$0xff]
      %v169 = vld [vmem:[%s4] sm:$0xf]
      %v170 = vld [vmem:[#allocation6] sm:$0xff]
      %v171 = vld [vmem:[#allocation2] sm:$0xff]
      %v172 = vld [vmem:[#allocation3] sm:$0xff]
      %v173 = vld [vmem:[#allocation9] sm:$0xf]
      %v174 = vunpack.c.l.bf16 %v173
      %v175 = vpack.c.bf16 %v174, %v174
      %v176 = vpack.c.bf16 %v171, %v171
      %v178 = vlaneseq
      %v179 = vshrl.u32 %v178, 7
      %v180 = vsub.s32 0, %v179
      %v181 = vrot.slane %v169, %v180
      %v182 = vlaneseq
      %v183 = vshrl.u32 %v182, 7
      %v184 = vsub.s32 1, %v183
      %v185 = vrot.slane %v169, %v184
      %v186 = vlaneseq
      %v187 = vshrl.u32 %v186, 7
      %v188 = vsub.s32 2, %v187
      %v189 = vrot.slane %v169, %v188
      %v190 = vlaneseq
      %v191 = vshrl.u32 %v190, 7
      %v192 = vsub.s32 3, %v191
      %v193 = vrot.slane %v169, %v192
      %v262 = vunpack.c.l.b16 %v105
      %v263 = vunpack.c.h.b16 %v105
      %v264 = vunpack.c.l.b16 %v106
      %v265 = vunpack.c.h.b16 %v106
      %v266 = vunpack.c.l.b16 %v107
      %v267 = vunpack.c.h.b16 %v107
      %v268 = vunpack.c.l.b16 %v108
      %v269 = vunpack.c.h.b16 %v108
      %v270 = vunpack.c.l.b16 %v109
      %v271 = vunpack.c.h.b16 %v109
      %v272 = vunpack.c.l.b16 %v110
      %v273 = vunpack.c.h.b16 %v110
      %v274 = vunpack.c.l.b16 %v111
      %v275 = vunpack.c.h.b16 %v111
      %v276 = vunpack.c.l.b16 %v112
      %v277 = vunpack.c.h.b16 %v112
      %v278 = vunpack.c.l.b16 %v113
      %v279 = vunpack.c.h.b16 %v113
      %v280 = vunpack.c.l.b16 %v114
      %v281 = vunpack.c.h.b16 %v114
      %v282 = vunpack.c.l.b16 %v115
      %v283 = vunpack.c.h.b16 %v115
      %v284 = vunpack.c.l.b16 %v116
      %v285 = vunpack.c.h.b16 %v116
      %v286 = vunpack.c.l.b16 %v117
      %v287 = vunpack.c.h.b16 %v117
      %v288 = vunpack.c.l.b16 %v118
      %v289 = vunpack.c.h.b16 %v118
      %v290 = vunpack.c.l.b16 %v119
      %v291 = vunpack.c.h.b16 %v119
      %v292 = vunpack.c.l.b16 %v120
      %v293 = vunpack.c.h.b16 %v120
      %v294 = vunpack.c.l.b16 %v121
      %v295 = vunpack.c.h.b16 %v121
      %v296 = vunpack.c.l.b16 %v122
      %v297 = vunpack.c.h.b16 %v122
      %v298 = vunpack.c.l.b16 %v123
      %v299 = vunpack.c.h.b16 %v123
      %v300 = vunpack.c.l.b16 %v124
      %v301 = vunpack.c.h.b16 %v124
      %v302 = vunpack.c.l.b16 %v125
      %v303 = vunpack.c.h.b16 %v125
      %v304 = vunpack.c.l.b16 %v126
      %v305 = vunpack.c.h.b16 %v126
      %v306 = vunpack.c.l.b16 %v127
      %v307 = vunpack.c.h.b16 %v127
      %v308 = vunpack.c.l.b16 %v128
      %v309 = vunpack.c.h.b16 %v128
      %v310 = vunpack.c.l.b16 %v129
      %v311 = vunpack.c.h.b16 %v129
      %v312 = vunpack.c.l.b16 %v130
      %v313 = vunpack.c.h.b16 %v130
      %v314 = vunpack.c.l.b16 %v131
      %v315 = vunpack.c.h.b16 %v131
      %v316 = vunpack.c.l.b16 %v132
      %v317 = vunpack.c.h.b16 %v132
      %v318 = vunpack.c.l.b16 %v133
      %v319 = vunpack.c.h.b16 %v133
      %v320 = vunpack.c.l.b16 %v134
      %v321 = vunpack.c.h.b16 %v134
      %v322 = vunpack.c.l.b16 %v135
      %v323 = vunpack.c.h.b16 %v135
      %v324 = vunpack.c.l.b16 %v136
      %v325 = vunpack.c.h.b16 %v136
      %v326 = vunpack.c.l.b16 %v137
      %v327 = vunpack.c.h.b16 %v137
      %v328 = vunpack.c.l.b16 %v138
      %v329 = vunpack.c.h.b16 %v138
      %v330 = vunpack.c.l.b16 %v139
      %v331 = vunpack.c.h.b16 %v139
      %v332 = vunpack.c.l.b16 %v140
      %v333 = vunpack.c.h.b16 %v140
      %v334 = vunpack.c.l.b16 %v141
      %v335 = vunpack.c.h.b16 %v141
      %v336 = vunpack.c.l.b16 %v142
      %v337 = vunpack.c.h.b16 %v142
      %v338 = vunpack.c.l.b16 %v143
      %v339 = vunpack.c.h.b16 %v143
      %v340 = vunpack.c.l.b16 %v144
      %v341 = vunpack.c.h.b16 %v144
      %v342 = vunpack.c.l.b16 %v145
      %v343 = vunpack.c.h.b16 %v145
      %v344 = vunpack.c.l.b16 %v146
      %v345 = vunpack.c.h.b16 %v146
      %v346 = vunpack.c.l.b16 %v147
      %v347 = vunpack.c.h.b16 %v147
      %v348 = vunpack.c.l.b16 %v148
      %v349 = vunpack.c.h.b16 %v148
      %v350 = vunpack.c.l.b16 %v149
      %v351 = vunpack.c.h.b16 %v149
      %v352 = vunpack.c.l.b16 %v150
      %v353 = vunpack.c.h.b16 %v150
      %v354 = vunpack.c.l.b16 %v151
      %v355 = vunpack.c.h.b16 %v151
      %v356 = vunpack.c.l.b16 %v152
      %v357 = vunpack.c.h.b16 %v152
      %v358 = vunpack.c.l.b16 %v153
      %v359 = vunpack.c.h.b16 %v153
      %v360 = vunpack.c.l.b16 %v154
      %v361 = vunpack.c.h.b16 %v154
      %v362 = vunpack.c.l.b16 %v155
      %v363 = vunpack.c.h.b16 %v155
      %v364 = vunpack.c.l.b16 %v156
      %v365 = vunpack.c.h.b16 %v156
      %v366 = vunpack.c.l.b16 %v157
      %v367 = vunpack.c.h.b16 %v157
      %v368 = vunpack.c.l.b16 %v158
      %v369 = vunpack.c.h.b16 %v158
      %v370 = vunpack.c.l.b16 %v159
      %v371 = vunpack.c.h.b16 %v159
      %v372 = vunpack.c.l.b16 %v160
      %v373 = vunpack.c.h.b16 %v160
      %v374 = vunpack.c.l.b16 %v161
      %v375 = vunpack.c.h.b16 %v161
      %v376 = vunpack.c.l.b16 %v162
      %v377 = vunpack.c.h.b16 %v162
      %v378 = vunpack.c.l.b16 %v163
      %v379 = vunpack.c.h.b16 %v163
      %v380 = vunpack.c.l.b16 %v164
      %v381 = vunpack.c.h.b16 %v164
      %v382 = vunpack.c.l.b16 %v165
      %v383 = vunpack.c.h.b16 %v165
      %v384 = vunpack.c.l.b16 %v166
      %v385 = vunpack.c.h.b16 %v166
      %v386 = vunpack.c.l.b16 %v167
      %v387 = vunpack.c.h.b16 %v167
      %v388 = vunpack.c.l.b16 %v168
      %v389 = vunpack.c.h.b16 %v168
      %v390 = vpack.c.b16 %v266, %v262
      %v391 = vpack.c.b16 %v267, %v263
      %v392 = vpack.c.b16 %v268, %v264
      %v393 = vpack.c.b16 %v269, %v265
      %v394 = vpack.c.b16 %v274, %v270
      %v395 = vpack.c.b16 %v275, %v271
      %v396 = vpack.c.b16 %v276, %v272
      %v397 = vpack.c.b16 %v277, %v273
      %v398 = vpack.c.b16 %v282, %v278
      %v399 = vpack.c.b16 %v283, %v279
      %v400 = vpack.c.b16 %v284, %v280
      %v401 = vpack.c.b16 %v285, %v281
      %v402 = vpack.c.b16 %v290, %v286
      %v403 = vpack.c.b16 %v291, %v287
      %v404 = vpack.c.b16 %v292, %v288
      %v405 = vpack.c.b16 %v293, %v289
      %v406 = vpack.c.b16 %v298, %v294
      %v407 = vpack.c.b16 %v299, %v295
      %v408 = vpack.c.b16 %v300, %v296
      %v409 = vpack.c.b16 %v301, %v297
      %v410 = vpack.c.b16 %v306, %v302
      %v411 = vpack.c.b16 %v307, %v303
      %v412 = vpack.c.b16 %v308, %v304
      %v413 = vpack.c.b16 %v309, %v305
      %v414 = vpack.c.b16 %v314, %v310
      %v415 = vpack.c.b16 %v315, %v311
      %v416 = vpack.c.b16 %v316, %v312
      %v417 = vpack.c.b16 %v317, %v313
      %v418 = vpack.c.b16 %v322, %v318
      %v419 = vpack.c.b16 %v323, %v319
      %v420 = vpack.c.b16 %v324, %v320
      %v421 = vpack.c.b16 %v325, %v321
      %v422 = vpack.c.b16 %v330, %v326
      %v423 = vpack.c.b16 %v331, %v327
      %v424 = vpack.c.b16 %v332, %v328
      %v425 = vpack.c.b16 %v333, %v329
      %v426 = vpack.c.b16 %v338, %v334
      %v427 = vpack.c.b16 %v339, %v335
      %v428 = vpack.c.b16 %v340, %v336
      %v429 = vpack.c.b16 %v341, %v337
      %v430 = vpack.c.b16 %v346, %v342
      %v431 = vpack.c.b16 %v347, %v343
      %v432 = vpack.c.b16 %v348, %v344
      %v433 = vpack.c.b16 %v349, %v345
      %v434 = vpack.c.b16 %v354, %v350
      %v435 = vpack.c.b16 %v355, %v351
      %v436 = vpack.c.b16 %v356, %v352
      %v437 = vpack.c.b16 %v357, %v353
      %v438 = vpack.c.b16 %v362, %v358
      %v439 = vpack.c.b16 %v363, %v359
      %v440 = vpack.c.b16 %v364, %v360
      %v441 = vpack.c.b16 %v365, %v361
      %v442 = vpack.c.b16 %v370, %v366
      %v443 = vpack.c.b16 %v371, %v367
      %v444 = vpack.c.b16 %v372, %v368
      %v445 = vpack.c.b16 %v373, %v369
      %v446 = vpack.c.b16 %v378, %v374
      %v447 = vpack.c.b16 %v379, %v375
      %v448 = vpack.c.b16 %v380, %v376
      %v449 = vpack.c.b16 %v381, %v377
      %v450 = vpack.c.b16 %v386, %v382
      %v451 = vpack.c.b16 %v387, %v383
      %v452 = vpack.c.b16 %v388, %v384
      %v453 = vpack.c.b16 %v389, %v385
      %518 = vmatprep.subr.bf16.mxu0 %v391
      %519 = vmatpush1.bf16.msra.mxu0 %v390
      %520 = vmatprep.subr.bf16.mxu0 %v395
      %521 = vmatpush1.bf16.msra.mxu0 %v394
      %522 = vmatprep.subr.bf16.mxu0 %v399
      %523 = vmatpush1.bf16.msra.mxu0 %v398
      %524 = vmatprep.subr.bf16.mxu0 %v403
      %525 = vmatpush1.bf16.msra.mxu0 %v402
      %526 = vmatprep.subr.bf16.mxu0 %v407
      %527 = vmatpush1.bf16.msra.mxu0 %v406
      %528 = vmatprep.subr.bf16.mxu0 %v411
      %529 = vmatpush1.bf16.msra.mxu0 %v410
      %530 = vmatprep.subr.bf16.mxu0 %v415
      %531 = vmatpush1.bf16.msra.mxu0 %v414
      %532 = vmatprep.subr.bf16.mxu0 %v419
      %533 = vmatpush1.bf16.msra.mxu0 %v418
      %534 = vmatprep.subr.bf16.mxu0 %v423
      %535 = vmatpush1.bf16.msra.mxu0 %v422
      %536 = vmatprep.subr.bf16.mxu0 %v427
      %537 = vmatpush1.bf16.msra.mxu0 %v426
      %538 = vmatprep.subr.bf16.mxu0 %v431
      %539 = vmatpush1.bf16.msra.mxu0 %v430
      %540 = vmatprep.subr.bf16.mxu0 %v435
      %541 = vmatpush1.bf16.msra.mxu0 %v434
      %542 = vmatprep.subr.bf16.mxu0 %v439
      %543 = vmatpush1.bf16.msra.mxu0 %v438
      %544 = vmatprep.subr.bf16.mxu0 %v443
      %545 = vmatpush1.bf16.msra.mxu0 %v442
      %546 = vmatprep.subr.bf16.mxu0 %v447
      %547 = vmatpush1.bf16.msra.mxu0 %v446
      %548 = vmatprep.subr.bf16.mxu0 %v451
      %549 = vmatpush1.bf16.msra.mxu0 %v450
      %550 = vmatprep.mubr.bf16.mxu0 %v176
      %551 = vmatmul.mubr.bf16.gmra.mrb[0].mxu0 %v175
      %v552 = vpop.f32.mrb[0].mxu0
      %v553 = vadd.f32 %v181, %v552
      %v554 = vpop.f32.mrb[0].mxu0
      %v555 = vadd.f32 %v185, %v554
      %v556 = vpop.f32.mrb[0].mxu0
      %v557 = vpop.f32.mrb[0].mxu0
      %558 = vdwg.mxu0
      %559 = vmatprep.subr.bf16.mxu0 %v393
      %560 = vmatpush1.bf16.msra.mxu0 %v392
      %561 = vmatprep.subr.bf16.mxu0 %v397
      %562 = vmatpush1.bf16.msra.mxu0 %v396
      %563 = vmatprep.subr.bf16.mxu0 %v401
      %564 = vmatpush1.bf16.msra.mxu0 %v400
      %565 = vmatprep.subr.bf16.mxu0 %v405
      %566 = vmatpush1.bf16.msra.mxu0 %v404
      %567 = vmatprep.subr.bf16.mxu0 %v409
      %568 = vmatpush1.bf16.msra.mxu0 %v408
      %569 = vmatprep.subr.bf16.mxu0 %v413
      %570 = vmatpush1.bf16.msra.mxu0 %v412
      %571 = vmatprep.subr.bf16.mxu0 %v417
      %572 = vmatpush1.bf16.msra.mxu0 %v416
      %573 = vmatprep.subr.bf16.mxu0 %v421
      %574 = vmatpush1.bf16.msra.mxu0 %v420
      %575 = vmatprep.subr.bf16.mxu0 %v425
      %576 = vmatpush1.bf16.msra.mxu0 %v424
      %577 = vmatprep.subr.bf16.mxu0 %v429
      %578 = vmatpush1.bf16.msra.mxu0 %v428
      %579 = vmatprep.subr.bf16.mxu0 %v433
      %580 = vmatpush1.bf16.msra.mxu0 %v432
      %581 = vmatprep.subr.bf16.mxu0 %v437
      %582 = vmatpush1.bf16.msra.mxu0 %v436
      %583 = vmatprep.subr.bf16.mxu0 %v441
      %584 = vmatpush1.bf16.msra.mxu0 %v440
      %585 = vmatprep.subr.bf16.mxu0 %v445
      %586 = vmatpush1.bf16.msra.mxu0 %v444
      %587 = vmatprep.subr.bf16.mxu0 %v449
      %588 = vmatpush1.bf16.msra.mxu0 %v448
      %589 = vmatprep.subr.bf16.mxu0 %v453
      %590 = vmatpush1.bf16.msra.mxu0 %v452
      %591 = vmatprep.mubr.bf16.mxu0 %v176
      %592 = vmatmul.mubr.bf16.gmra.mrb[0].mxu0 %v175
      %v593 = vpop.f32.mrb[0].mxu0
      %v594 = vadd.f32 %v189, %v593
      %v595 = vpop.f32.mrb[0].mxu0
      %v596 = vadd.f32 %v193, %v595
      %v597 = vpop.f32.mrb[0].mxu0
      %v598 = vpop.f32.mrb[0].mxu0
      %599 = vdwg.mxu0
      %v600 = vxor.u32 %v553, 2147483648
      %v601 = vmul.f32 %v600, 1.442695
      %v602 = vpow.pop %v601
      %v603 = vadd.f32 %v602, 1.0
      %v604 = vrcp.pop %v603
      %v605 = vmul.f32 1.0, %v604
      %v606 = vxor.u32 %v555, 2147483648
      %v607 = vmul.f32 %v606, 1.442695
      %v608 = vpow.pop %v607
      %v609 = vadd.f32 %v608, 1.0
      %v610 = vrcp.pop %v609
      %v611 = vmul.f32 1.0, %v610
      %v612 = vtanh.pop %v594
      %v613 = vxor.u32 %v596, 2147483648
      %v614 = vmul.f32 %v613, 1.442695
      %v615 = vpow.pop %v614
      %v616 = vadd.f32 %v615, 1.0
      %v617 = vrcp.pop %v616
      %v618 = vmul.f32 1.0, %v617
      %v619 = vmul.f32 %v611, %v172
      %v620 = vmul.f32 %v605, %v612
      %v621 = vadd.f32 %v619, %v620
      %v622 = vtanh.pop %v621
      %v623 = vmul.f32 %v618, %v622
      %v624 = vstv %s100
      %vm625 = vcmp.lt.s32.totalorder %v624, %v170
      %v626 = vsel %vm625, %v623, %v171
      %v627 = vsel %vm625, %v621, %v172
      %s628 = scalar_lea.vmem [#allocation9], 4
      %v629 = vld [vmem:[%s628] sm:$0xf]
      %v630 = vunpack.c.l.bf16 %v629
      %v631 = vpack.c.bf16 %v630, %v630
      %v632 = vpack.c.bf16 %v626, %v626
      %633 = vmatprep.subr.bf16.mxu0 %v391
      %634 = vmatpush1.bf16.msra.mxu0 %v390
      %635 = vmatprep.subr.bf16.mxu0 %v395
      %636 = vmatpush1.bf16.msra.mxu0 %v394
      %637 = vmatprep.subr.bf16.mxu0 %v399
      %638 = vmatpush1.bf16.msra.mxu0 %v398
      %639 = vmatprep.subr.bf16.mxu0 %v403
      %640 = vmatpush1.bf16.msra.mxu0 %v402
      %641 = vmatprep.subr.bf16.mxu0 %v407
      %642 = vmatpush1.bf16.msra.mxu0 %v406
      %643 = vmatprep.subr.bf16.mxu0 %v411
      %644 = vmatpush1.bf16.msra.mxu0 %v410
      %645 = vmatprep.subr.bf16.mxu0 %v415
      %646 = vmatpush1.bf16.msra.mxu0 %v414
      %647 = vmatprep.subr.bf16.mxu0 %v419
      %648 = vmatpush1.bf16.msra.mxu0 %v418
      %649 = vmatprep.subr.bf16.mxu0 %v423
      %650 = vmatpush1.bf16.msra.mxu0 %v422
      %651 = vmatprep.subr.bf16.mxu0 %v427
      %652 = vmatpush1.bf16.msra.mxu0 %v426
      %653 = vmatprep.subr.bf16.mxu0 %v431
      %654 = vmatpush1.bf16.msra.mxu0 %v430
      %655 = vmatprep.subr.bf16.mxu0 %v435
      %656 = vmatpush1.bf16.msra.mxu0 %v434
      %657 = vmatprep.subr.bf16.mxu0 %v439
      %658 = vmatpush1.bf16.msra.mxu0 %v438
      %659 = vmatprep.subr.bf16.mxu0 %v443
      %660 = vmatpush1.bf16.msra.mxu0 %v442
      %661 = vmatprep.subr.bf16.mxu0 %v447
      %662 = vmatpush1.bf16.msra.mxu0 %v446
      %663 = vmatprep.subr.bf16.mxu0 %v451
      %664 = vmatpush1.bf16.msra.mxu0 %v450
      %665 = vmatprep.mubr.bf16.mxu0 %v632
      %666 = vmatmul.mubr.bf16.gmra.mrb[0].mxu0 %v631
      %v667 = vpop.f32.mrb[0].mxu0
      %v668 = vadd.f32 %v181, %v667
      %v669 = vpop.f32.mrb[0].mxu0
      %v670 = vadd.f32 %v185, %v669
      %v671 = vpop.f32.mrb[0].mxu0
      %v672 = vpop.f32.mrb[0].mxu0
      %673 = vdwg.mxu0
      %674 = vmatprep.subr.bf16.mxu0 %v393
      %675 = vmatpush1.bf16.msra.mxu0 %v392
      %676 = vmatprep.subr.bf16.mxu0 %v397
      %677 = vmatpush1.bf16.msra.mxu0 %v396
      %678 = vmatprep.subr.bf16.mxu0 %v401
      %679 = vmatpush1.bf16.msra.mxu0 %v400
      %680 = vmatprep.subr.bf16.mxu0 %v405
      %681 = vmatpush1.bf16.msra.mxu0 %v404
      %682 = vmatprep.subr.bf16.mxu0 %v409
      %683 = vmatpush1.bf16.msra.mxu0 %v408
      %684 = vmatprep.subr.bf16.mxu0 %v413
      %685 = vmatpush1.bf16.msra.mxu0 %v412
      %686 = vmatprep.subr.bf16.mxu0 %v417
      %687 = vmatpush1.bf16.msra.mxu0 %v416
      %688 = vmatprep.subr.bf16.mxu0 %v421
      %689 = vmatpush1.bf16.msra.mxu0 %v420
      %690 = vmatprep.subr.bf16.mxu0 %v425
      %691 = vmatpush1.bf16.msra.mxu0 %v424
      %692 = vmatprep.subr.bf16.mxu0 %v429
      %693 = vmatpush1.bf16.msra.mxu0 %v428
      %694 = vmatprep.subr.bf16.mxu0 %v433
      %695 = vmatpush1.bf16.msra.mxu0 %v432
      %696 = vmatprep.subr.bf16.mxu0 %v437
      %697 = vmatpush1.bf16.msra.mxu0 %v436
      %698 = vmatprep.subr.bf16.mxu0 %v441
      %699 = vmatpush1.bf16.msra.mxu0 %v440
      %700 = vmatprep.subr.bf16.mxu0 %v445
      %701 = vmatpush1.bf16.msra.mxu0 %v444
      %702 = vmatprep.subr.bf16.mxu0 %v449
      %703 = vmatpush1.bf16.msra.mxu0 %v448
      %704 = vmatprep.subr.bf16.mxu0 %v453
      %705 = vmatpush1.bf16.msra.mxu0 %v452
      %706 = vmatprep.mubr.bf16.mxu0 %v632
      %707 = vmatmul.mubr.bf16.gmra.mrb[0].mxu0 %v631
      %v708 = vpop.f32.mrb[0].mxu0
      %v709 = vadd.f32 %v189, %v708
      %v710 = vpop.f32.mrb[0].mxu0
      %v711 = vadd.f32 %v193, %v710
      %v712 = vpop.f32.mrb[0].mxu0
      %v713 = vpop.f32.mrb[0].mxu0
      %714 = vdwg.mxu0
      %v715 = vxor.u32 %v668, 2147483648
      %v716 = vmul.f32 %v715, 1.442695
      %v717 = vpow.pop %v716
      %v718 = vadd.f32 %v717, 1.0
      %v719 = vrcp.pop %v718
      %v720 = vmul.f32 1.0, %v719
      %v721 = vxor.u32 %v670, 2147483648
      %v722 = vmul.f32 %v721, 1.442695
      %v723 = vpow.pop %v722
      %v724 = vadd.f32 %v723, 1.0
      %v725 = vrcp.pop %v724
      %v726 = vmul.f32 1.0, %v725
      %v727 = vtanh.pop %v709
      %v728 = vxor.u32 %v711, 2147483648
      %v729 = vmul.f32 %v728, 1.442695
      %v730 = vpow.pop %v729
      %v731 = vadd.f32 %v730, 1.0
      %v732 = vrcp.pop %v731
      %v733 = vmul.f32 1.0, %v732
      %v734 = vmul.f32 %v726, %v627
      %v735 = vmul.f32 %v720, %v727
      %v736 = vadd.f32 %v734, %v735
      %v737 = vtanh.pop %v736
      %v738 = vmul.f32 %v733, %v737
      %s739 = sadd.s32 %s100, 1
      %v740 = vstv %s739
      %vm741 = vcmp.lt.s32.totalorder %v740, %v170
      %v742 = vsel %vm741, %v738, %v626
      %v743 = vsel %vm741, %v736, %v627
      %s744 = scalar_lea.vmem [#allocation9], 8
      %v745 = vld [vmem:[%s744] sm:$0xf]
      %v746 = vunpack.c.l.bf16 %v745
      %v747 = vpack.c.bf16 %v746, %v746
      %v748 = vpack.c.bf16 %v742, %v742
      %749 = vmatprep.subr.bf16.mxu0 %v391
      %750 = vmatpush1.bf16.msra.mxu0 %v390
      %751 = vmatprep.subr.bf16.mxu0 %v395
      %752 = vmatpush1.bf16.msra.mxu0 %v394
      %753 = vmatprep.subr.bf16.mxu0 %v399
      %754 = vmatpush1.bf16.msra.mxu0 %v398
      %755 = vmatprep.subr.bf16.mxu0 %v403
      %756 = vmatpush1.bf16.msra.mxu0 %v402
      %757 = vmatprep.subr.bf16.mxu0 %v407
      %758 = vmatpush1.bf16.msra.mxu0 %v406
      %759 = vmatprep.subr.bf16.mxu0 %v411
      %760 = vmatpush1.bf16.msra.mxu0 %v410
      %761 = vmatprep.subr.bf16.mxu0 %v415
      %762 = vmatpush1.bf16.msra.mxu0 %v414
      %763 = vmatprep.subr.bf16.mxu0 %v419
      %764 = vmatpush1.bf16.msra.mxu0 %v418
      %765 = vmatprep.subr.bf16.mxu0 %v423
      %766 = vmatpush1.bf16.msra.mxu0 %v422
      %767 = vmatprep.subr.bf16.mxu0 %v427
      %768 = vmatpush1.bf16.msra.mxu0 %v426
      %769 = vmatprep.subr.bf16.mxu0 %v431
      %770 = vmatpush1.bf16.msra.mxu0 %v430
      %771 = vmatprep.subr.bf16.mxu0 %v435
      %772 = vmatpush1.bf16.msra.mxu0 %v434
      %773 = vmatprep.subr.bf16.mxu0 %v439
      %774 = vmatpush1.bf16.msra.mxu0 %v438
      %775 = vmatprep.subr.bf16.mxu0 %v443
      %776 = vmatpush1.bf16.msra.mxu0 %v442
      %777 = vmatprep.subr.bf16.mxu0 %v447
      %778 = vmatpush1.bf16.msra.mxu0 %v446
      %779 = vmatprep.subr.bf16.mxu0 %v451
      %780 = vmatpush1.bf16.msra.mxu0 %v450
      %781 = vmatprep.mubr.bf16.mxu0 %v748
      %782 = vmatmul.mubr.bf16.gmra.mrb[0].mxu0 %v747
      %v783 = vpop.f32.mrb[0].mxu0
      %v784 = vadd.f32 %v181, %v783
      %v785 = vpop.f32.mrb[0].mxu0
      %v786 = vadd.f32 %v185, %v785
      %v787 = vpop.f32.mrb[0].mxu0
      %v788 = vpop.f32.mrb[0].mxu0
      %789 = vdwg.mxu0
      %790 = vmatprep.subr.bf16.mxu0 %v393
      %791 = vmatpush1.bf16.msra.mxu0 %v392
      %792 = vmatprep.subr.bf16.mxu0 %v397
      %793 = vmatpush1.bf16.msra.mxu0 %v396
      %794 = vmatprep.subr.bf16.mxu0 %v401
      %795 = vmatpush1.bf16.msra.mxu0 %v400
      %796 = vmatprep.subr.bf16.mxu0 %v405
      %797 = vmatpush1.bf16.msra.mxu0 %v404
      %798 = vmatprep.subr.bf16.mxu0 %v409
      %799 = vmatpush1.bf16.msra.mxu0 %v408
      %800 = vmatprep.subr.bf16.mxu0 %v413
      %801 = vmatpush1.bf16.msra.mxu0 %v412
      %802 = vmatprep.subr.bf16.mxu0 %v417
      %803 = vmatpush1.bf16.msra.mxu0 %v416
      %804 = vmatprep.subr.bf16.mxu0 %v421
      %805 = vmatpush1.bf16.msra.mxu0 %v420
      %806 = vmatprep.subr.bf16.mxu0 %v425
      %807 = vmatpush1.bf16.msra.mxu0 %v424
      %808 = vmatprep.subr.bf16.mxu0 %v429
      %809 = vmatpush1.bf16.msra.mxu0 %v428
      %810 = vmatprep.subr.bf16.mxu0 %v433
      %811 = vmatpush1.bf16.msra.mxu0 %v432
      %812 = vmatprep.subr.bf16.mxu0 %v437
      %813 = vmatpush1.bf16.msra.mxu0 %v436
      %814 = vmatprep.subr.bf16.mxu0 %v441
      %815 = vmatpush1.bf16.msra.mxu0 %v440
      %816 = vmatprep.subr.bf16.mxu0 %v445
      %817 = vmatpush1.bf16.msra.mxu0 %v444
      %818 = vmatprep.subr.bf16.mxu0 %v449
      %819 = vmatpush1.bf16.msra.mxu0 %v448
      %820 = vmatprep.subr.bf16.mxu0 %v453
      %821 = vmatpush1.bf16.msra.mxu0 %v452
      %822 = vmatprep.mubr.bf16.mxu0 %v748
      %823 = vmatmul.mubr.bf16.gmra.mrb[0].mxu0 %v747
      %v824 = vpop.f32.mrb[0].mxu0
      %v825 = vadd.f32 %v189, %v824
      %v826 = vpop.f32.mrb[0].mxu0
      %v827 = vadd.f32 %v193, %v826
      %v828 = vpop.f32.mrb[0].mxu0
      %v829 = vpop.f32.mrb[0].mxu0
      %830 = vdwg.mxu0
      %v831 = vxor.u32 %v784, 2147483648
      %v832 = vmul.f32 %v831, 1.442695
      %v833 = vpow.pop %v832
      %v834 = vadd.f32 %v833, 1.0
      %v835 = vrcp.pop %v834
      %v836 = vmul.f32 1.0, %v835
      %v837 = vxor.u32 %v786, 2147483648
      %v838 = vmul.f32 %v837, 1.442695
      %v839 = vpow.pop %v838
      %v840 = vadd.f32 %v839, 1.0
      %v841 = vrcp.pop %v840
      %v842 = vmul.f32 1.0, %v841
      %v843 = vtanh.pop %v825
      %v844 = vxor.u32 %v827, 2147483648
      %v845 = vmul.f32 %v844, 1.442695
      %v846 = vpow.pop %v845
      %v847 = vadd.f32 %v846, 1.0
      %v848 = vrcp.pop %v847
      %v849 = vmul.f32 1.0, %v848
      %v850 = vmul.f32 %v842, %v743
      %v851 = vmul.f32 %v836, %v843
      %v852 = vadd.f32 %v850, %v851
      %v853 = vtanh.pop %v852
      %v854 = vmul.f32 %v849, %v853
      %s855 = sadd.s32 %s100, 2
      %v856 = vstv %s855
      %vm857 = vcmp.lt.s32.totalorder %v856, %v170
      %v858 = vsel %vm857, %v854, %v742
      %v859 = vsel %vm857, %v852, %v743
      %s860 = scalar_lea.vmem [#allocation9], 12
      %v861 = vld [vmem:[%s860] sm:$0xf]
      %v862 = vunpack.c.l.bf16 %v861
      %v863 = vpack.c.bf16 %v862, %v862
      %v864 = vpack.c.bf16 %v858, %v858
      %865 = vmatprep.subr.bf16.mxu0 %v391
      %866 = vmatpush1.bf16.msra.mxu0 %v390
      %867 = vmatprep.subr.bf16.mxu0 %v395
      %868 = vmatpush1.bf16.msra.mxu0 %v394
      %869 = vmatprep.subr.bf16.mxu0 %v399
      %870 = vmatpush1.bf16.msra.mxu0 %v398
      %871 = vmatprep.subr.bf16.mxu0 %v403
      %872 = vmatpush1.bf16.msra.mxu0 %v402
      %873 = vmatprep.subr.bf16.mxu0 %v407
      %874 = vmatpush1.bf16.msra.mxu0 %v406
      %875 = vmatprep.subr.bf16.mxu0 %v411
      %876 = vmatpush1.bf16.msra.mxu0 %v410
      %877 = vmatprep.subr.bf16.mxu0 %v415
      %878 = vmatpush1.bf16.msra.mxu0 %v414
      %879 = vmatprep.subr.bf16.mxu0 %v419
      %880 = vmatpush1.bf16.msra.mxu0 %v418
      %881 = vmatprep.subr.bf16.mxu0 %v423
      %882 = vmatpush1.bf16.msra.mxu0 %v422
      %883 = vmatprep.subr.bf16.mxu0 %v427
      %884 = vmatpush1.bf16.msra.mxu0 %v426
      %885 = vmatprep.subr.bf16.mxu0 %v431
      %886 = vmatpush1.bf16.msra.mxu0 %v430
      %887 = vmatprep.subr.bf16.mxu0 %v435
      %888 = vmatpush1.bf16.msra.mxu0 %v434
      %889 = vmatprep.subr.bf16.mxu0 %v439
      %890 = vmatpush1.bf16.msra.mxu0 %v438
      %891 = vmatprep.subr.bf16.mxu0 %v443
      %892 = vmatpush1.bf16.msra.mxu0 %v442
      %893 = vmatprep.subr.bf16.mxu0 %v447
      %894 = vmatpush1.bf16.msra.mxu0 %v446
      %895 = vmatprep.subr.bf16.mxu0 %v451
      %896 = vmatpush1.bf16.msra.mxu0 %v450
      %897 = vmatprep.mubr.bf16.mxu0 %v864
      %898 = vmatmul.mubr.bf16.gmra.mrb[0].mxu0 %v863
      %v899 = vpop.f32.mrb[0].mxu0
      %v900 = vadd.f32 %v181, %v899
      %v901 = vpop.f32.mrb[0].mxu0
      %v902 = vadd.f32 %v185, %v901
      %v903 = vpop.f32.mrb[0].mxu0
      %v904 = vpop.f32.mrb[0].mxu0
      %905 = vdwg.mxu0
      %906 = vmatprep.subr.bf16.mxu0 %v393
      %907 = vmatpush1.bf16.msra.mxu0 %v392
      %908 = vmatprep.subr.bf16.mxu0 %v397
      %909 = vmatpush1.bf16.msra.mxu0 %v396
      %910 = vmatprep.subr.bf16.mxu0 %v401
      %911 = vmatpush1.bf16.msra.mxu0 %v400
      %912 = vmatprep.subr.bf16.mxu0 %v405
      %913 = vmatpush1.bf16.msra.mxu0 %v404
      %914 = vmatprep.subr.bf16.mxu0 %v409
      %915 = vmatpush1.bf16.msra.mxu0 %v408
      %916 = vmatprep.subr.bf16.mxu0 %v413
      %917 = vmatpush1.bf16.msra.mxu0 %v412
      %918 = vmatprep.subr.bf16.mxu0 %v417
      %919 = vmatpush1.bf16.msra.mxu0 %v416
      %920 = vmatprep.subr.bf16.mxu0 %v421
      %921 = vmatpush1.bf16.msra.mxu0 %v420
      %922 = vmatprep.subr.bf16.mxu0 %v425
      %923 = vmatpush1.bf16.msra.mxu0 %v424
      %924 = vmatprep.subr.bf16.mxu0 %v429
      %925 = vmatpush1.bf16.msra.mxu0 %v428
      %926 = vmatprep.subr.bf16.mxu0 %v433
      %927 = vmatpush1.bf16.msra.mxu0 %v432
      %928 = vmatprep.subr.bf16.mxu0 %v437
      %929 = vmatpush1.bf16.msra.mxu0 %v436
      %930 = vmatprep.subr.bf16.mxu0 %v441
      %931 = vmatpush1.bf16.msra.mxu0 %v440
      %932 = vmatprep.subr.bf16.mxu0 %v445
      %933 = vmatpush1.bf16.msra.mxu0 %v444
      %934 = vmatprep.subr.bf16.mxu0 %v449
      %935 = vmatpush1.bf16.msra.mxu0 %v448
      %936 = vmatprep.subr.bf16.mxu0 %v453
      %937 = vmatpush1.bf16.msra.mxu0 %v452
      %938 = vmatprep.mubr.bf16.mxu0 %v864
      %939 = vmatmul.mubr.bf16.gmra.mrb[0].mxu0 %v863
      %v940 = vpop.f32.mrb[0].mxu0
      %v941 = vadd.f32 %v189, %v940
      %v942 = vpop.f32.mrb[0].mxu0
      %v943 = vadd.f32 %v193, %v942
      %v944 = vpop.f32.mrb[0].mxu0
      %v945 = vpop.f32.mrb[0].mxu0
      %946 = vdwg.mxu0
      %v947 = vxor.u32 %v900, 2147483648
      %v948 = vmul.f32 %v947, 1.442695
      %v949 = vpow.pop %v948
      %v950 = vadd.f32 %v949, 1.0
      %v951 = vrcp.pop %v950
      %v952 = vmul.f32 1.0, %v951
      %v953 = vxor.u32 %v902, 2147483648
      %v954 = vmul.f32 %v953, 1.442695
      %v955 = vpow.pop %v954
      %v956 = vadd.f32 %v955, 1.0
      %v957 = vrcp.pop %v956
      %v958 = vmul.f32 1.0, %v957
      %v959 = vtanh.pop %v941
      %v960 = vxor.u32 %v943, 2147483648
      %v961 = vmul.f32 %v960, 1.442695
      %v962 = vpow.pop %v961
      %v963 = vadd.f32 %v962, 1.0
      %v964 = vrcp.pop %v963
      %v965 = vmul.f32 1.0, %v964
      %v966 = vmul.f32 %v958, %v859
      %v967 = vmul.f32 %v952, %v959
      %v968 = vadd.f32 %v966, %v967
      %v969 = vtanh.pop %v968
      %v970 = vmul.f32 %v965, %v969
      %s971 = sadd.s32 %s100, 3
      %v972 = vstv %s971
      %vm973 = vcmp.lt.s32.totalorder %v972, %v170
      %v974 = vsel %vm973, %v970, %v858
      %v975 = vsel %vm973, %v968, %v859
      %s976 = scalar_lea.vmem [#allocation9], 16
      %v977 = vld [vmem:[%s976] sm:$0xf]
      %v978 = vunpack.c.l.bf16 %v977
      %v979 = vpack.c.bf16 %v978, %v978
      %v980 = vpack.c.bf16 %v974, %v974
      %981 = vmatprep.subr.bf16.mxu0 %v391
      %982 = vmatpush1.bf16.msra.mxu0 %v390
      %983 = vmatprep.subr.bf16.mxu0 %v395
      %984 = vmatpush1.bf16.msra.mxu0 %v394
      %985 = vmatprep.subr.bf16.mxu0 %v399
      %986 = vmatpush1.bf16.msra.mxu0 %v398
      %987 = vmatprep.subr.bf16.mxu0 %v403
      %988 = vmatpush1.bf16.msra.mxu0 %v402
      %989 = vmatprep.subr.bf16.mxu0 %v407
      %990 = vmatpush1.bf16.msra.mxu0 %v406
      %991 = vmatprep.subr.bf16.mxu0 %v411
      %992 = vmatpush1.bf16.msra.mxu0 %v410
      %993 = vmatprep.subr.bf16.mxu0 %v415
      %994 = vmatpush1.bf16.msra.mxu0 %v414
      %995 = vmatprep.subr.bf16.mxu0 %v419
      %996 = vmatpush1.bf16.msra.mxu0 %v418
      %997 = vmatprep.subr.bf16.mxu0 %v423
      %998 = vmatpush1.bf16.msra.mxu0 %v422
      %999 = vmatprep.subr.bf16.mxu0 %v427
      %1000 = vmatpush1.bf16.msra.mxu0 %v426
      %1001 = vmatprep.subr.bf16.mxu0 %v431
      %1002 = vmatpush1.bf16.msra.mxu0 %v430
      %1003 = vmatprep.subr.bf16.mxu0 %v435
      %1004 = vmatpush1.bf16.msra.mxu0 %v434
      %1005 = vmatprep.subr.bf16.mxu0 %v439
      %1006 = vmatpush1.bf16.msra.mxu0 %v438
      %1007 = vmatprep.subr.bf16.mxu0 %v443
      %1008 = vmatpush1.bf16.msra.mxu0 %v442
      %1009 = vmatprep.subr.bf16.mxu0 %v447
      %1010 = vmatpush1.bf16.msra.mxu0 %v446
      %1011 = vmatprep.subr.bf16.mxu0 %v451
      %1012 = vmatpush1.bf16.msra.mxu0 %v450
      %1013 = vmatprep.mubr.bf16.mxu0 %v980
      %1014 = vmatmul.mubr.bf16.gmra.mrb[0].mxu0 %v979
      %v1015 = vpop.f32.mrb[0].mxu0
      %v1016 = vadd.f32 %v181, %v1015
      %v1017 = vpop.f32.mrb[0].mxu0
      %v1018 = vadd.f32 %v185, %v1017
      %v1019 = vpop.f32.mrb[0].mxu0
      %v1020 = vpop.f32.mrb[0].mxu0
      %1021 = vdwg.mxu0
      %1022 = vmatprep.subr.bf16.mxu0 %v393
      %1023 = vmatpush1.bf16.msra.mxu0 %v392
      %1024 = vmatprep.subr.bf16.mxu0 %v397
      %1025 = vmatpush1.bf16.msra.mxu0 %v396
      %1026 = vmatprep.subr.bf16.mxu0 %v401
      %1027 = vmatpush1.bf16.msra.mxu0 %v400
      %1028 = vmatprep.subr.bf16.mxu0 %v405
      %1029 = vmatpush1.bf16.msra.mxu0 %v404
      %1030 = vmatprep.subr.bf16.mxu0 %v409
      %1031 = vmatpush1.bf16.msra.mxu0 %v408
      %1032 = vmatprep.subr.bf16.mxu0 %v413
      %1033 = vmatpush1.bf16.msra.mxu0 %v412
      %1034 = vmatprep.subr.bf16.mxu0 %v417
      %1035 = vmatpush1.bf16.msra.mxu0 %v416
      %1036 = vmatprep.subr.bf16.mxu0 %v421
      %1037 = vmatpush1.bf16.msra.mxu0 %v420
      %1038 = vmatprep.subr.bf16.mxu0 %v425
      %1039 = vmatpush1.bf16.msra.mxu0 %v424
      %1040 = vmatprep.subr.bf16.mxu0 %v429
      %1041 = vmatpush1.bf16.msra.mxu0 %v428
      %1042 = vmatprep.subr.bf16.mxu0 %v433
      %1043 = vmatpush1.bf16.msra.mxu0 %v432
      %1044 = vmatprep.subr.bf16.mxu0 %v437
      %1045 = vmatpush1.bf16.msra.mxu0 %v436
      %1046 = vmatprep.subr.bf16.mxu0 %v441
      %1047 = vmatpush1.bf16.msra.mxu0 %v440
      %1048 = vmatprep.subr.bf16.mxu0 %v445
      %1049 = vmatpush1.bf16.msra.mxu0 %v444
      %1050 = vmatprep.subr.bf16.mxu0 %v449
      %1051 = vmatpush1.bf16.msra.mxu0 %v448
      %1052 = vmatprep.subr.bf16.mxu0 %v453
      %1053 = vmatpush1.bf16.msra.mxu0 %v452
      %1054 = vmatprep.mubr.bf16.mxu0 %v980
      %1055 = vmatmul.mubr.bf16.gmra.mrb[0].mxu0 %v979
      %v1056 = vpop.f32.mrb[0].mxu0
      %v1057 = vadd.f32 %v189, %v1056
      %v1058 = vpop.f32.mrb[0].mxu0
      %v1059 = vadd.f32 %v193, %v1058
      %v1060 = vpop.f32.mrb[0].mxu0
      %v1061 = vpop.f32.mrb[0].mxu0
      %1062 = vdwg.mxu0
      %v1063 = vxor.u32 %v1016, 2147483648
      %v1064 = vmul.f32 %v1063, 1.442695
      %v1065 = vpow.pop %v1064
      %v1066 = vadd.f32 %v1065, 1.0
      %v1067 = vrcp.pop %v1066
      %v1068 = vmul.f32 1.0, %v1067
      %v1069 = vxor.u32 %v1018, 2147483648
      %v1070 = vmul.f32 %v1069, 1.442695
      %v1071 = vpow.pop %v1070
      %v1072 = vadd.f32 %v1071, 1.0
      %v1073 = vrcp.pop %v1072
      %v1074 = vmul.f32 1.0, %v1073
      %v1075 = vtanh.pop %v1057
      %v1076 = vxor.u32 %v1059, 2147483648
      %v1077 = vmul.f32 %v1076, 1.442695
      %v1078 = vpow.pop %v1077
      %v1079 = vadd.f32 %v1078, 1.0
      %v1080 = vrcp.pop %v1079
      %v1081 = vmul.f32 1.0, %v1080
      %v1082 = vmul.f32 %v1074, %v975
      %v1083 = vmul.f32 %v1068, %v1075
      %v1084 = vadd.f32 %v1082, %v1083
      %v1085 = vtanh.pop %v1084
      %v1086 = vmul.f32 %v1081, %v1085
      %s1087 = sadd.s32 %s100, 4
      %v1088 = vstv %s1087
      %vm1089 = vcmp.lt.s32.totalorder %v1088, %v170
      %v1090 = vsel %vm1089, %v1086, %v974
      %v1091 = vsel %vm1089, %v1084, %v975
      %s1092 = scalar_lea.vmem [#allocation9], 20
      %v1093 = vld [vmem:[%s1092] sm:$0xf]
      %v1094 = vunpack.c.l.bf16 %v1093
      %v1095 = vpack.c.bf16 %v1094, %v1094
      %v1096 = vpack.c.bf16 %v1090, %v1090
      %1097 = vmatprep.subr.bf16.mxu0 %v391
      %1098 = vmatpush1.bf16.msra.mxu0 %v390
      %1099 = vmatprep.subr.bf16.mxu0 %v395
      %1100 = vmatpush1.bf16.msra.mxu0 %v394
      %1101 = vmatprep.subr.bf16.mxu0 %v399
      %1102 = vmatpush1.bf16.msra.mxu0 %v398
      %1103 = vmatprep.subr.bf16.mxu0 %v403
      %1104 = vmatpush1.bf16.msra.mxu0 %v402
      %1105 = vmatprep.subr.bf16.mxu0 %v407
      %1106 = vmatpush1.bf16.msra.mxu0 %v406
      %1107 = vmatprep.subr.bf16.mxu0 %v411
      %1108 = vmatpush1.bf16.msra.mxu0 %v410
      %1109 = vmatprep.subr.bf16.mxu0 %v415
      %1110 = vmatpush1.bf16.msra.mxu0 %v414
      %1111 = vmatprep.subr.bf16.mxu0 %v419
      %1112 = vmatpush1.bf16.msra.mxu0 %v418
      %1113 = vmatprep.subr.bf16.mxu0 %v423
      %1114 = vmatpush1.bf16.msra.mxu0 %v422
      %1115 = vmatprep.subr.bf16.mxu0 %v427
      %1116 = vmatpush1.bf16.msra.mxu0 %v426
      %1117 = vmatprep.subr.bf16.mxu0 %v431
      %1118 = vmatpush1.bf16.msra.mxu0 %v430
      %1119 = vmatprep.subr.bf16.mxu0 %v435
      %1120 = vmatpush1.bf16.msra.mxu0 %v434
      %1121 = vmatprep.subr.bf16.mxu0 %v439
      %1122 = vmatpush1.bf16.msra.mxu0 %v438
      %1123 = vmatprep.subr.bf16.mxu0 %v443
      %1124 = vmatpush1.bf16.msra.mxu0 %v442
      %1125 = vmatprep.subr.bf16.mxu0 %v447
      %1126 = vmatpush1.bf16.msra.mxu0 %v446
      %1127 = vmatprep.subr.bf16.mxu0 %v451
      %1128 = vmatpush1.bf16.msra.mxu0 %v450
      %1129 = vmatprep.mubr.bf16.mxu0 %v1096
      %1130 = vmatmul.mubr.bf16.gmra.mrb[0].mxu0 %v1095
      %v1131 = vpop.f32.mrb[0].mxu0
      %v1132 = vadd.f32 %v181, %v1131
      %v1133 = vpop.f32.mrb[0].mxu0
      %v1134 = vadd.f32 %v185, %v1133
      %v1135 = vpop.f32.mrb[0].mxu0
      %v1136 = vpop.f32.mrb[0].mxu0
      %1137 = vdwg.mxu0
      %1138 = vmatprep.subr.bf16.mxu0 %v393
      %1139 = vmatpush1.bf16.msra.mxu0 %v392
      %1140 = vmatprep.subr.bf16.mxu0 %v397
      %1141 = vmatpush1.bf16.msra.mxu0 %v396
      %1142 = vmatprep.subr.bf16.mxu0 %v401
      %1143 = vmatpush1.bf16.msra.mxu0 %v400
      %1144 = vmatprep.subr.bf16.mxu0 %v405
      %1145 = vmatpush1.bf16.msra.mxu0 %v404
      %1146 = vmatprep.subr.bf16.mxu0 %v409
      %1147 = vmatpush1.bf16.msra.mxu0 %v408
      %1148 = vmatprep.subr.bf16.mxu0 %v413
      %1149 = vmatpush1.bf16.msra.mxu0 %v412
      %1150 = vmatprep.subr.bf16.mxu0 %v417
      %1151 = vmatpush1.bf16.msra.mxu0 %v416
      %1152 = vmatprep.subr.bf16.mxu0 %v421
      %1153 = vmatpush1.bf16.msra.mxu0 %v420
      %1154 = vmatprep.subr.bf16.mxu0 %v425
      %1155 = vmatpush1.bf16.msra.mxu0 %v424
      %1156 = vmatprep.subr.bf16.mxu0 %v429
      %1157 = vmatpush1.bf16.msra.mxu0 %v428
      %1158 = vmatprep.subr.bf16.mxu0 %v433
      %1159 = vmatpush1.bf16.msra.mxu0 %v432
      %1160 = vmatprep.subr.bf16.mxu0 %v437
      %1161 = vmatpush1.bf16.msra.mxu0 %v436
      %1162 = vmatprep.subr.bf16.mxu0 %v441
      %1163 = vmatpush1.bf16.msra.mxu0 %v440
      %1164 = vmatprep.subr.bf16.mxu0 %v445
      %1165 = vmatpush1.bf16.msra.mxu0 %v444
      %1166 = vmatprep.subr.bf16.mxu0 %v449
      %1167 = vmatpush1.bf16.msra.mxu0 %v448
      %1168 = vmatprep.subr.bf16.mxu0 %v453
      %1169 = vmatpush1.bf16.msra.mxu0 %v452
      %1170 = vmatprep.mubr.bf16.mxu0 %v1096
      %1171 = vmatmul.mubr.bf16.gmra.mrb[0].mxu0 %v1095
      %v1172 = vpop.f32.mrb[0].mxu0
      %v1173 = vadd.f32 %v189, %v1172
      %v1174 = vpop.f32.mrb[0].mxu0
      %v1175 = vadd.f32 %v193, %v1174
      %v1176 = vpop.f32.mrb[0].mxu0
      %v1177 = vpop.f32.mrb[0].mxu0
      %1178 = vdwg.mxu0
      %v1179 = vxor.u32 %v1132, 2147483648
      %v1180 = vmul.f32 %v1179, 1.442695
      %v1181 = vpow.pop %v1180
      %v1182 = vadd.f32 %v1181, 1.0
      %v1183 = vrcp.pop %v1182
      %v1184 = vmul.f32 1.0, %v1183
      %v1185 = vxor.u32 %v1134, 2147483648
      %v1186 = vmul.f32 %v1185, 1.442695
      %v1187 = vpow.pop %v1186
      %v1188 = vadd.f32 %v1187, 1.0
      %v1189 = vrcp.pop %v1188
      %v1190 = vmul.f32 1.0, %v1189
      %v1191 = vtanh.pop %v1173
      %v1192 = vxor.u32 %v1175, 2147483648
      %v1193 = vmul.f32 %v1192, 1.442695
      %v1194 = vpow.pop %v1193
      %v1195 = vadd.f32 %v1194, 1.0
      %v1196 = vrcp.pop %v1195
      %v1197 = vmul.f32 1.0, %v1196
      %v1198 = vmul.f32 %v1190, %v1091
      %v1199 = vmul.f32 %v1184, %v1191
      %v1200 = vadd.f32 %v1198, %v1199
      %v1201 = vtanh.pop %v1200
      %v1202 = vmul.f32 %v1197, %v1201
      %s1203 = sadd.s32 %s100, 5
      %v1204 = vstv %s1203
      %vm1205 = vcmp.lt.s32.totalorder %v1204, %v170
      %v1206 = vsel %vm1205, %v1202, %v1090
      %v1207 = vsel %vm1205, %v1200, %v1091
      %s1208 = scalar_lea.vmem [#allocation9], 24
      %v1209 = vld [vmem:[%s1208] sm:$0xf]
      %v1210 = vunpack.c.l.bf16 %v1209
      %v1211 = vpack.c.bf16 %v1210, %v1210
      %v1212 = vpack.c.bf16 %v1206, %v1206
      %1213 = vmatprep.subr.bf16.mxu0 %v391
      %1214 = vmatpush1.bf16.msra.mxu0 %v390
      %1215 = vmatprep.subr.bf16.mxu0 %v395
      %1216 = vmatpush1.bf16.msra.mxu0 %v394
      %1217 = vmatprep.subr.bf16.mxu0 %v399
      %1218 = vmatpush1.bf16.msra.mxu0 %v398
      %1219 = vmatprep.subr.bf16.mxu0 %v403
      %1220 = vmatpush1.bf16.msra.mxu0 %v402
      %1221 = vmatprep.subr.bf16.mxu0 %v407
      %1222 = vmatpush1.bf16.msra.mxu0 %v406
      %1223 = vmatprep.subr.bf16.mxu0 %v411
      %1224 = vmatpush1.bf16.msra.mxu0 %v410
      %1225 = vmatprep.subr.bf16.mxu0 %v415
      %1226 = vmatpush1.bf16.msra.mxu0 %v414
      %1227 = vmatprep.subr.bf16.mxu0 %v419
      %1228 = vmatpush1.bf16.msra.mxu0 %v418
      %1229 = vmatprep.subr.bf16.mxu0 %v423
      %1230 = vmatpush1.bf16.msra.mxu0 %v422
      %1231 = vmatprep.subr.bf16.mxu0 %v427
      %1232 = vmatpush1.bf16.msra.mxu0 %v426
      %1233 = vmatprep.subr.bf16.mxu0 %v431
      %1234 = vmatpush1.bf16.msra.mxu0 %v430
      %1235 = vmatprep.subr.bf16.mxu0 %v435
      %1236 = vmatpush1.bf16.msra.mxu0 %v434
      %1237 = vmatprep.subr.bf16.mxu0 %v439
      %1238 = vmatpush1.bf16.msra.mxu0 %v438
      %1239 = vmatprep.subr.bf16.mxu0 %v443
      %1240 = vmatpush1.bf16.msra.mxu0 %v442
      %1241 = vmatprep.subr.bf16.mxu0 %v447
      %1242 = vmatpush1.bf16.msra.mxu0 %v446
      %1243 = vmatprep.subr.bf16.mxu0 %v451
      %1244 = vmatpush1.bf16.msra.mxu0 %v450
      %1245 = vmatprep.mubr.bf16.mxu0 %v1212
      %1246 = vmatmul.mubr.bf16.gmra.mrb[0].mxu0 %v1211
      %v1247 = vpop.f32.mrb[0].mxu0
      %v1248 = vadd.f32 %v181, %v1247
      %v1249 = vpop.f32.mrb[0].mxu0
      %v1250 = vadd.f32 %v185, %v1249
      %v1251 = vpop.f32.mrb[0].mxu0
      %v1252 = vpop.f32.mrb[0].mxu0
      %1253 = vdwg.mxu0
      %1254 = vmatprep.subr.bf16.mxu0 %v393
      %1255 = vmatpush1.bf16.msra.mxu0 %v392
      %1256 = vmatprep.subr.bf16.mxu0 %v397
      %1257 = vmatpush1.bf16.msra.mxu0 %v396
      %1258 = vmatprep.subr.bf16.mxu0 %v401
      %1259 = vmatpush1.bf16.msra.mxu0 %v400
      %1260 = vmatprep.subr.bf16.mxu0 %v405
      %1261 = vmatpush1.bf16.msra.mxu0 %v404
      %1262 = vmatprep.subr.bf16.mxu0 %v409
      %1263 = vmatpush1.bf16.msra.mxu0 %v408
      %1264 = vmatprep.subr.bf16.mxu0 %v413
      %1265 = vmatpush1.bf16.msra.mxu0 %v412
      %1266 = vmatprep.subr.bf16.mxu0 %v417
      %1267 = vmatpush1.bf16.msra.mxu0 %v416
      %1268 = vmatprep.subr.bf16.mxu0 %v421
      %1269 = vmatpush1.bf16.msra.mxu0 %v420
      %1270 = vmatprep.subr.bf16.mxu0 %v425
      %1271 = vmatpush1.bf16.msra.mxu0 %v424
      %1272 = vmatprep.subr.bf16.mxu0 %v429
      %1273 = vmatpush1.bf16.msra.mxu0 %v428
      %1274 = vmatprep.subr.bf16.mxu0 %v433
      %1275 = vmatpush1.bf16.msra.mxu0 %v432
      %1276 = vmatprep.subr.bf16.mxu0 %v437
      %1277 = vmatpush1.bf16.msra.mxu0 %v436
      %1278 = vmatprep.subr.bf16.mxu0 %v441
      %1279 = vmatpush1.bf16.msra.mxu0 %v440
      %1280 = vmatprep.subr.bf16.mxu0 %v445
      %1281 = vmatpush1.bf16.msra.mxu0 %v444
      %1282 = vmatprep.subr.bf16.mxu0 %v449
      %1283 = vmatpush1.bf16.msra.mxu0 %v448
      %1284 = vmatprep.subr.bf16.mxu0 %v453
      %1285 = vmatpush1.bf16.msra.mxu0 %v452
      %1286 = vmatprep.mubr.bf16.mxu0 %v1212
      %1287 = vmatmul.mubr.bf16.gmra.mrb[0].mxu0 %v1211
      %v1288 = vpop.f32.mrb[0].mxu0
      %v1289 = vadd.f32 %v189, %v1288
      %v1290 = vpop.f32.mrb[0].mxu0
      %v1291 = vadd.f32 %v193, %v1290
      %v1292 = vpop.f32.mrb[0].mxu0
      %v1293 = vpop.f32.mrb[0].mxu0
      %1294 = vdwg.mxu0
      %v1295 = vxor.u32 %v1248, 2147483648
      %v1296 = vmul.f32 %v1295, 1.442695
      %v1297 = vpow.pop %v1296
      %v1298 = vadd.f32 %v1297, 1.0
      %v1299 = vrcp.pop %v1298
      %v1300 = vmul.f32 1.0, %v1299
      %v1301 = vxor.u32 %v1250, 2147483648
      %v1302 = vmul.f32 %v1301, 1.442695
      %v1303 = vpow.pop %v1302
      %v1304 = vadd.f32 %v1303, 1.0
      %v1305 = vrcp.pop %v1304
      %v1306 = vmul.f32 1.0, %v1305
      %v1307 = vtanh.pop %v1289
      %v1308 = vxor.u32 %v1291, 2147483648
      %v1309 = vmul.f32 %v1308, 1.442695
      %v1310 = vpow.pop %v1309
      %v1311 = vadd.f32 %v1310, 1.0
      %v1312 = vrcp.pop %v1311
      %v1313 = vmul.f32 1.0, %v1312
      %v1314 = vmul.f32 %v1306, %v1207
      %v1315 = vmul.f32 %v1300, %v1307
      %v1316 = vadd.f32 %v1314, %v1315
      %v1317 = vtanh.pop %v1316
      %v1318 = vmul.f32 %v1313, %v1317
      %s1319 = sadd.s32 %s100, 6
      %v1320 = vstv %s1319
      %vm1321 = vcmp.lt.s32.totalorder %v1320, %v170
      %v1322 = vsel %vm1321, %v1318, %v1206
      %v1323 = vsel %vm1321, %v1316, %v1207
      %s1324 = scalar_lea.vmem [#allocation9], 28
      %v1325 = vld [vmem:[%s1324] sm:$0xf]
      %v1326 = vunpack.c.l.bf16 %v1325
      %v1327 = vpack.c.bf16 %v1326, %v1326
      %v1328 = vpack.c.bf16 %v1322, %v1322
      %1329 = vmatprep.subr.bf16.mxu0 %v391
      %1330 = vmatpush1.bf16.msra.mxu0 %v390
      %1331 = vmatprep.subr.bf16.mxu0 %v395
      %1332 = vmatpush1.bf16.msra.mxu0 %v394
      %1333 = vmatprep.subr.bf16.mxu0 %v399
      %1334 = vmatpush1.bf16.msra.mxu0 %v398
      %1335 = vmatprep.subr.bf16.mxu0 %v403
      %1336 = vmatpush1.bf16.msra.mxu0 %v402
      %1337 = vmatprep.subr.bf16.mxu0 %v407
      %1338 = vmatpush1.bf16.msra.mxu0 %v406
      %1339 = vmatprep.subr.bf16.mxu0 %v411
      %1340 = vmatpush1.bf16.msra.mxu0 %v410
      %1341 = vmatprep.subr.bf16.mxu0 %v415
      %1342 = vmatpush1.bf16.msra.mxu0 %v414
      %1343 = vmatprep.subr.bf16.mxu0 %v419
      %1344 = vmatpush1.bf16.msra.mxu0 %v418
      %1345 = vmatprep.subr.bf16.mxu0 %v423
      %1346 = vmatpush1.bf16.msra.mxu0 %v422
      %1347 = vmatprep.subr.bf16.mxu0 %v427
      %1348 = vmatpush1.bf16.msra.mxu0 %v426
      %1349 = vmatprep.subr.bf16.mxu0 %v431
      %1350 = vmatpush1.bf16.msra.mxu0 %v430
      %1351 = vmatprep.subr.bf16.mxu0 %v435
      %1352 = vmatpush1.bf16.msra.mxu0 %v434
      %1353 = vmatprep.subr.bf16.mxu0 %v439
      %1354 = vmatpush1.bf16.msra.mxu0 %v438
      %1355 = vmatprep.subr.bf16.mxu0 %v443
      %1356 = vmatpush1.bf16.msra.mxu0 %v442
      %1357 = vmatprep.subr.bf16.mxu0 %v447
      %1358 = vmatpush1.bf16.msra.mxu0 %v446
      %1359 = vmatprep.subr.bf16.mxu0 %v451
      %1360 = vmatpush1.bf16.msra.mxu0 %v450
      %1361 = vmatprep.mubr.bf16.mxu0 %v1328
      %1362 = vmatmul.mubr.bf16.gmra.mrb[0].mxu0 %v1327
      %v1363 = vpop.f32.mrb[0].mxu0
      %v1364 = vadd.f32 %v181, %v1363
      %v1365 = vpop.f32.mrb[0].mxu0
      %v1366 = vadd.f32 %v185, %v1365
      %v1367 = vpop.f32.mrb[0].mxu0
      %v1368 = vpop.f32.mrb[0].mxu0
      %1369 = vdwg.mxu0
      %1370 = vmatprep.subr.bf16.mxu0 %v393
      %1371 = vmatpush1.bf16.msra.mxu0 %v392
      %1372 = vmatprep.subr.bf16.mxu0 %v397
      %1373 = vmatpush1.bf16.msra.mxu0 %v396
      %1374 = vmatprep.subr.bf16.mxu0 %v401
      %1375 = vmatpush1.bf16.msra.mxu0 %v400
      %1376 = vmatprep.subr.bf16.mxu0 %v405
      %1377 = vmatpush1.bf16.msra.mxu0 %v404
      %1378 = vmatprep.subr.bf16.mxu0 %v409
      %1379 = vmatpush1.bf16.msra.mxu0 %v408
      %1380 = vmatprep.subr.bf16.mxu0 %v413
      %1381 = vmatpush1.bf16.msra.mxu0 %v412
      %1382 = vmatprep.subr.bf16.mxu0 %v417
      %1383 = vmatpush1.bf16.msra.mxu0 %v416
      %1384 = vmatprep.subr.bf16.mxu0 %v421
      %1385 = vmatpush1.bf16.msra.mxu0 %v420
      %1386 = vmatprep.subr.bf16.mxu0 %v425
      %1387 = vmatpush1.bf16.msra.mxu0 %v424
      %1388 = vmatprep.subr.bf16.mxu0 %v429
      %1389 = vmatpush1.bf16.msra.mxu0 %v428
      %1390 = vmatprep.subr.bf16.mxu0 %v433
      %1391 = vmatpush1.bf16.msra.mxu0 %v432
      %1392 = vmatprep.subr.bf16.mxu0 %v437
      %1393 = vmatpush1.bf16.msra.mxu0 %v436
      %1394 = vmatprep.subr.bf16.mxu0 %v441
      %1395 = vmatpush1.bf16.msra.mxu0 %v440
      %1396 = vmatprep.subr.bf16.mxu0 %v445
      %1397 = vmatpush1.bf16.msra.mxu0 %v444
      %1398 = vmatprep.subr.bf16.mxu0 %v449
      %1399 = vmatpush1.bf16.msra.mxu0 %v448
      %1400 = vmatprep.subr.bf16.mxu0 %v453
      %1401 = vmatpush1.bf16.msra.mxu0 %v452
      %1402 = vmatprep.mubr.bf16.mxu0 %v1328
      %1403 = vmatmul.mubr.bf16.gmra.mrb[0].mxu0 %v1327
      %v1404 = vpop.f32.mrb[0].mxu0
      %v1405 = vadd.f32 %v189, %v1404
      %v1406 = vpop.f32.mrb[0].mxu0
      %v1407 = vadd.f32 %v193, %v1406
      %v1408 = vpop.f32.mrb[0].mxu0
      %v1409 = vpop.f32.mrb[0].mxu0
      %1410 = vdwg.mxu0
      %v1411 = vxor.u32 %v1364, 2147483648
      %v1412 = vmul.f32 %v1411, 1.442695
      %v1413 = vpow.pop %v1412
      %v1414 = vadd.f32 %v1413, 1.0
      %v1415 = vrcp.pop %v1414
      %v1416 = vmul.f32 1.0, %v1415
      %v1417 = vxor.u32 %v1366, 2147483648
      %v1418 = vmul.f32 %v1417, 1.442695
      %v1419 = vpow.pop %v1418
      %v1420 = vadd.f32 %v1419, 1.0
      %v1421 = vrcp.pop %v1420
      %v1422 = vmul.f32 1.0, %v1421
      %v1423 = vtanh.pop %v1405
      %v1424 = vxor.u32 %v1407, 2147483648
      %v1425 = vmul.f32 %v1424, 1.442695
      %v1426 = vpow.pop %v1425
      %v1427 = vadd.f32 %v1426, 1.0
      %v1428 = vrcp.pop %v1427
      %v1429 = vmul.f32 1.0, %v1428
      %v1430 = vmul.f32 %v1422, %v1323
      %v1431 = vmul.f32 %v1416, %v1423
      %v1432 = vadd.f32 %v1430, %v1431
      %v1433 = vtanh.pop %v1432
      %v1434 = vmul.f32 %v1429, %v1433
      %s1435 = sadd.s32 %s100, 7
      %v1436 = vstv %s1435
      %vm1437 = vcmp.lt.s32.totalorder %v1436, %v170
      %v1438 = vsel %vm1437, %v1434, %v1322
      %v1439 = vsel %vm1437, %v1432, %v1323
      %1440 = vst [vmem:[#allocation2] sm:$0xff] %v1438
      %1441 = vst [vmem:[#allocation3] sm:$0xff] %v1439
    $region49: #{tpu_custom_call.1} parent=1 // pred_fallthru
      _
    // Predicated region
    $region50: #{tpu_custom_call.1} parent=1 // pred_check
      %p1442 = pneg %p93
    $region51: #{tpu_custom_call.1} parent=1 // pred_check_branch
      %1444 = sbr.rel (%p1442) target = $region53
    $region52: #{tpu_custom_call.1} parent=1 // pred_region
      %v1445 = vld [vmem:[#allocation2] sm:$0xff]
      %v1446 = vpack.c.bf16 %v1445, %v1445
      %v1447 = vld [vmem:[#allocation12] sm:$0xf]
      %v1448 = vld [vmem:[#allocation12 + $0x4] sm:$0xf]
      %v1449 = vld [vmem:[#allocation12 + $0x8] sm:$0xf]
      %v1450 = vld [vmem:[#allocation12 + $0xc] sm:$0xf]
      %v1451 = vld [vmem:[#allocation12 + $0x10] sm:$0xf]
      %v1452 = vld [vmem:[#allocation12 + $0x14] sm:$0xf]
      %v1453 = vld [vmem:[#allocation12 + $0x18] sm:$0xf]
      %v1454 = vld [vmem:[#allocation12 + $0x1c] sm:$0xf]
      %v1455 = vld [vmem:[#allocation12 + $0x20] sm:$0xf]
      %v1456 = vld [vmem:[#allocation12 + $0x24] sm:$0xf]
      %v1457 = vld [vmem:[#allocation12 + $0x28] sm:$0xf]
      %v1458 = vld [vmem:[#allocation12 + $0x2c] sm:$0xf]
      %v1459 = vld [vmem:[#allocation12 + $0x30] sm:$0xf]
      %v1460 = vld [vmem:[#allocation12 + $0x34] sm:$0xf]
      %v1461 = vld [vmem:[#allocation12 + $0x38] sm:$0xf]
      %v1462 = vld [vmem:[#allocation12 + $0x3c] sm:$0xf]
      %v1463 = vld [vmem:[%s6] sm:$0x1]
      %v1465 = vlaneseq
      %v1466 = vshrl.u32 %v1465, 7
      %v1467 = vsub.s32 0, %v1466
      %v1468 = vrot.slane %v1463, %v1467
      %v1486 = vunpack.c.l.b16 %v1447
      %v1487 = vunpack.c.l.b16 %v1448
      %v1488 = vunpack.c.l.b16 %v1449
      %v1489 = vunpack.c.l.b16 %v1450
      %v1490 = vunpack.c.l.b16 %v1451
      %v1491 = vunpack.c.l.b16 %v1452
      %v1492 = vunpack.c.l.b16 %v1453
      %v1493 = vunpack.c.l.b16 %v1454
      %v1494 = vunpack.c.l.b16 %v1455
      %v1495 = vunpack.c.l.b16 %v1456
      %v1496 = vunpack.c.l.b16 %v1457
      %v1497 = vunpack.c.l.b16 %v1458
      %v1498 = vunpack.c.l.b16 %v1459
      %v1499 = vunpack.c.l.b16 %v1460
      %v1500 = vunpack.c.l.b16 %v1461
      %v1501 = vunpack.c.l.b16 %v1462
      %v1502 = vpack.c.b16 %v1487, %v1486
      %v1503 = vpack.c.b16 %v1489, %v1488
      %v1504 = vpack.c.b16 %v1491, %v1490
      %v1505 = vpack.c.b16 %v1493, %v1492
      %v1506 = vpack.c.b16 %v1495, %v1494
      %v1507 = vpack.c.b16 %v1497, %v1496
      %v1508 = vpack.c.b16 %v1499, %v1498
      %v1509 = vpack.c.b16 %v1501, %v1500
      %1518 = vmatprep.subr.bf16.mxu0 0
      %1519 = vmatpush1.bf16.msra.mxu0 %v1502
      %1520 = vmatprep.subr.bf16.mxu0 0
      %1521 = vmatpush1.bf16.msra.mxu0 %v1503
      %1522 = vmatprep.subr.bf16.mxu0 0
      %1523 = vmatpush1.bf16.msra.mxu0 %v1504
      %1524 = vmatprep.subr.bf16.mxu0 0
      %1525 = vmatpush1.bf16.msra.mxu0 %v1505
      %1526 = vmatprep.subr.bf16.mxu0 0
      %1527 = vmatpush1.bf16.msra.mxu0 %v1506
      %1528 = vmatprep.subr.bf16.mxu0 0
      %1529 = vmatpush1.bf16.msra.mxu0 %v1507
      %1530 = vmatprep.subr.bf16.mxu0 0
      %1531 = vmatpush1.bf16.msra.mxu0 %v1508
      %1532 = vmatprep.subr.bf16.mxu0 0
      %1533 = vmatpush1.bf16.msra.mxu0 %v1509
      %1534 = vmatprep.subr.bf16.mxu0 0
      %1535 = vmatpush1.bf16.msra.mxu0 0
      %1536 = vmatprep.subr.bf16.mxu0 0
      %1537 = vmatpush1.bf16.msra.mxu0 0
      %1538 = vmatprep.subr.bf16.mxu0 0
      %1539 = vmatpush1.bf16.msra.mxu0 0
      %1540 = vmatprep.subr.bf16.mxu0 0
      %1541 = vmatpush1.bf16.msra.mxu0 0
      %1542 = vmatprep.subr.bf16.mxu0 0
      %1543 = vmatpush1.bf16.msra.mxu0 0
      %1544 = vmatprep.subr.bf16.mxu0 0
      %1545 = vmatpush1.bf16.msra.mxu0 0
      %1546 = vmatprep.subr.bf16.mxu0 0
      %1547 = vmatpush1.bf16.msra.mxu0 0
      %1548 = vmatprep.subr.bf16.mxu0 0
      %1549 = vmatpush1.bf16.msra.mxu0 0
      %1550 = vmatprep.mubr.bf16.mxu0 0
      %1551 = vmatmul.mubr.bf16.gmra.mrb[0].mxu0 %v1446
      %v1552 = vpop.f32.mrb[0].mxu0
      %v1553 = vadd.f32 %v1468, %v1552
      %v1554 = vpop.f32.mrb[0].mxu0
      %v1555 = vpop.f32.mrb[0].mxu0
      %v1556 = vpop.f32.mrb[0].mxu0
      %1557 = vdwg.mxu0
      %1558 = vst [vmem:[#allocation14] sm:$0xff] %v1553
    $region53: #{tpu_custom_call.1} parent=1 // pred_fallthru
      _
    // Predicated region
    $region54: #{tpu_custom_call.1} parent=1 // pred_check
      _
    $region55: #{tpu_custom_call.1} parent=1 // pred_check_branch
      %1560 = sbr.rel (0) target = $region57
    $region56: #{tpu_custom_call.1} parent=1 // pred_region
      %s1562 = ssub.s32 128, 128
      %1563 = vsyncadd [#allocation8], %s1562
      %s1565 = sshll.u32 [#allocation14], 4
      %s1566 = int_to_ptr.vmem [resolvable:$true] %s1565
      %1568 = dma.vmem_to_hbm [thread:$0]  %s1566, 128, %s7, [#allocation8]
    $region57: #{tpu_custom_call.1} parent=1 // pred_fallthru
      _
    // Predicated region
    $region58: #{tpu_custom_call.1} parent=1 // pred_check
      _
    $region59: #{tpu_custom_call.1} parent=1 // pred_check_branch
      %1570 = sbr.rel (0) target = $region61
    $region60: #{tpu_custom_call.1} parent=1 // pred_region
      %1571 = dma.done [#allocation8], 128
    $region61: #{tpu_custom_call.1} parent=1 // pred_fallthru
      _
    %1572 = vsyncpa [#allocation7], 1
    %1573 = vsyncpa [#allocation10], 1
    %1574 = vsyncpa [#allocation13], 1
    %1575 = vsyncpa [#allocation8], 1

</llo_original>
